<compile_context>
chip_gen: v7x
topology: tpu7x:2x2x1
jax: 0.10.0
libtpu: 0.0.40
codegen_flags: <defaults>
</compile_context>

<pallas_src>
import functools
import math

import jax
import jax.numpy as jnp
from jax import lax
from jax.experimental import pallas as pl
from jax.experimental.pallas import tpu as pltpu


# ---------------------------------------------------------------------------
# Tile-size helper: largest tile <= preferred that divides `dim` and is a
# multiple of `quantum`; falls back to the full dimension (always legal).
# ---------------------------------------------------------------------------
def _pick_tile(dim, preferred, quantum):
    if dim <= preferred:
        return dim
    t = (min(preferred, dim) // quantum) * quantum
    while t >= quantum:
        if dim % t == 0:
            return t
        t -= quantum
    # TODO(synk): pad awkward dims to a tile multiple instead of degrading to a
    # full-dimension tile (which can blow VMEM for very long sequences).
    return dim


def _kv_block_spec(block_shape, index_map):
    """K/V streaming spec with 3-deep buffering when this Pallas exposes it."""
    try:
        return pl.BlockSpec(block_shape, index_map, pipeline_mode=pl.Buffered(3))
    except Exception:  # pipeline_mode/Buffered unavailable -> default double buffer
        return pl.BlockSpec(block_shape, index_map)


# ---------------------------------------------------------------------------
# Kernel 1: tiled matmul  y = x @ w   (w already pre-transposed / pre-packed)
# MXU is fed in `mxu_dtype` (bf16 by default), accumulation stays f32.
# ---------------------------------------------------------------------------
def _matmul_kernel(x_ref, w_ref, o_ref, acc_ref, *, mxu_dtype):
    @pl.when(pl.program_id(2) == 0)
    def _():
        acc_ref[...] = jnp.zeros_like(acc_ref)

    acc_ref[...] += jnp.dot(x_ref[...].astype(mxu_dtype),
                            w_ref[...].astype(mxu_dtype),
                            preferred_element_type=jnp.float32)

    @pl.when(pl.program_id(2) == pl.num_programs(2) - 1)
    def _():
        o_ref[...] = acc_ref[...].astype(o_ref.dtype)


def matmul(x, w, *, out_dtype=None, mxu_dtype=jnp.bfloat16,
           tm=256, tn=512, tk=512):
    """x: (M, K), w: (K, N)  ->  (M, N) in out_dtype (default: x.dtype)."""
    M, K = x.shape
    K2, N = w.shape
    assert K == K2
    out_dtype = x.dtype if out_dtype is None else out_dtype
    tm = _pick_tile(M, tm, 8)
    tn = _pick_tile(N, tn, 128)
    tk = _pick_tile(K, tk, 128)
    grid = (M // tm, N // tn, K // tk)
    bytes_accessed = (M * K * x.dtype.itemsize + K * N * w.dtype.itemsize
                      + M * N * jnp.dtype(out_dtype).itemsize)
    kernel = functools.partial(_matmul_kernel, mxu_dtype=mxu_dtype)
    return pl.pallas_call(
        kernel,
        out_shape=jax.ShapeDtypeStruct((M, N), out_dtype),
        grid_spec=pltpu.PrefetchScalarGridSpec(
            num_scalar_prefetch=0,
            grid=grid,
            in_specs=[
                pl.BlockSpec((tm, tk), lambda i, j, k: (i, k)),
                pl.BlockSpec((tk, tn), lambda i, j, k: (k, j)),
            ],
            out_specs=pl.BlockSpec((tm, tn), lambda i, j, k: (i, j)),
            scratch_shapes=[pltpu.VMEM((tm, tn), jnp.float32)],
        ),
        compiler_params=pltpu.CompilerParams(
            dimension_semantics=("parallel", "parallel", "arbitrary"),
            vmem_limit_bytes=32 * 1024 * 1024),   # raise v5e's 16 MiB default
        cost_estimate=pl.CostEstimate(
            flops=2 * M * N * K, transcendentals=0,
            bytes_accessed=bytes_accessed),
    )(x, w)


# ---------------------------------------------------------------------------
# Kernel 2: flash-style causal attention on a lower-trapezoid (qi, ki) grid.
#   hpb = heads processed per grid step (block width = hpb * d_k lanes).
# ---------------------------------------------------------------------------
def _make_flash_kernel(hpb, d_k, tq, tkv, scale, compute_dtype):
    def kernel(qi_ref, ki_ref, q_ref, k_ref, v_ref, o_ref, *scratch):
        qs_ref = scratch[0]                      # scaled Q, compute_dtype
        m_refs = scratch[1:1 + hpb]              # per-head running max (f32)
        l_refs = scratch[1 + hpb:1 + 2 * hpb]    # per-head running denom (f32)
        acc_refs = scratch[1 + 2 * hpb:1 + 3 * hpb]  # per-head accumulators (f32)

        step = pl.program_id(2)
        qi = qi_ref[step]
        ki = ki_ref[step]

        @pl.when(ki == 0)
        def _init():
            # Q is resident across the whole kv sweep for this q tile: scale
            # (in f32) and cast it to the MXU dtype exactly once.
            qs_ref[...] = (q_ref[...].astype(jnp.float32) * scale
                           ).astype(compute_dtype)
            for h in range(hpb):
                m_refs[h][...] = jnp.full(m_refs[h].shape, -jnp.inf, jnp.float32)
                l_refs[h][...] = jnp.zeros_like(l_refs[h])
                acc_refs[h][...] = jnp.zeros_like(acc_refs[h])

        def update(masked):
            q_all = qs_ref[...]                  # (tq, hpb*d_k), scaled, bf16
            k_all = k_ref[...]                   # (tkv, hpb*d_k)
            v_all = v_ref[...]
            if masked:
                # Only tiles straddling the diagonal pay for the mask; it is
                # built once and shared across the heads in this block.
                row = qi * tq + lax.broadcasted_iota(jnp.int32, (tq, tkv), 0)
                col = ki * tkv + lax.broadcasted_iota(jnp.int32, (tq, tkv), 1)
                penalty = jnp.where(col <= row, 0.0, 1.0e10).astype(jnp.float32)
            for h in range(hpb):
                sl = slice(h * d_k, (h + 1) * d_k)
                # q . k^T via dot_general contracting last dims: no transpose.
                s = lax.dot_general(q_all[:, sl], k_all[:, sl],
                                    (((1,), (1,)), ((), ())),
                                    preferred_element_type=jnp.float32)
                if masked:
                    s = s - penalty              # matches the reference -1e10 mask
                m_prev = m_refs[h][...]
                m_new = jnp.maximum(m_prev, jnp.max(s, axis=-1, keepdims=True))
                alpha = jnp.exp(m_prev - m_new)
                p = jnp.exp(s - m_new)
                l_refs[h][...] = alpha * l_refs[h][...] + jnp.sum(
                    p, axis=-1, keepdims=True)
                acc_refs[h][...] = alpha * acc_refs[h][...] + jnp.dot(
                    p.astype(compute_dtype), v_all[:, sl],
                    preferred_element_type=jnp.float32)
                m_refs[h][...] = m_new

        # Mask only needed if this kv tile reaches past the q tile's first row.
        needs_mask = (ki * tkv + tkv - 1) > (qi * tq)

        @pl.when(jnp.logical_not(needs_mask))
        def _():
            update(masked=False)

        @pl.when(needs_mask)
        def _():
            update(masked=True)

        # Last kv tile for this q tile -> normalize and write the output block.
        last_ki = ((qi + 1) * tq - 1) // tkv

        @pl.when(ki == last_ki)
        def _finalize():
            outs = []
            for h in range(hpb):
                inv_l = pl.reciprocal(l_refs[h][...], approx=True)
                outs.append(acc_refs[h][...] * inv_l)
            o = outs[0] if hpb == 1 else jnp.concatenate(outs, axis=-1)
            o_ref[...] = o.astype(o_ref.dtype)

    return kernel


def causal_flash_attention(qkv, num_heads, d_model, *, tq=256, tkv=512,
                           compute_dtype=jnp.bfloat16, out_dtype=None):
    """qkv: (B, S, 3*d_model) laid out as [Q | K | V] column blocks.
    Returns (B, S, d_model) in merged-head layout."""
    B, S, three_d = qkv.shape
    assert three_d == 3 * d_model
    d_k = d_model // num_heads
    out_dtype = qkv.dtype if out_dtype is None else out_dtype
    scale = 1.0 / math.sqrt(d_k)

    tq = _pick_tile(S, tq, 8)
    tkv = _pick_tile(S, tkv, 8)
    n_q = S // tq

    # Lower-trapezoid (qi, ki) schedule: fully-masked tiles are never visited.
    pairs = [(qi, ki) for qi in range(n_q)
             for ki in range(((qi + 1) * tq - 1) // tkv + 1)]
    qi_arr = jnp.asarray([p[0] for p in pairs], dtype=jnp.int32)
    ki_arr = jnp.asarray([p[1] for p in pairs], dtype=jnp.int32)
    n_steps = len(pairs)

    params = pltpu.CompilerParams(
        dimension_semantics=("parallel", "parallel", "arbitrary"),
        vmem_limit_bytes=32 * 1024 * 1024)
    cost = pl.CostEstimate(
        flops=2 * 2 * B * num_heads * (S * S // 2) * d_k,
        transcendentals=B * num_heads * S * S // 2,
        bytes_accessed=(qkv.size * qkv.dtype.itemsize
                        + B * S * d_model * jnp.dtype(out_dtype).itemsize))

    # Heads per grid step: keep every q/k/v/out block >= 128 lanes wide.
    if d_k % 128 == 0:
        hpb = 1
    elif 128 % d_k == 0 and num_heads % (128 // d_k) == 0:
        hpb = 128 // d_k
    else:
        hpb = 0   # -> generic fallback layout below

    if hpb:
        G = num_heads // hpb          # head groups (one group per grid step)
        width = hpb * d_k             # lane width of each block (multiple of 128)
        kernel = _make_flash_kernel(hpb, d_k, tq, tkv, scale, compute_dtype)
        scratch = ([pltpu.VMEM((tq, width), compute_dtype)]
                   + [pltpu.VMEM((tq, 1), jnp.float32) for _ in range(hpb)]
                   + [pltpu.VMEM((tq, 1), jnp.float32) for _ in range(hpb)]
                   + [pltpu.VMEM((tq, d_k), jnp.float32) for _ in range(hpb)])

        def q_map(b, g, s, qi_r, ki_r):
            return (b, qi_r[s], g)

        def k_map(b, g, s, qi_r, ki_r):
            return (b, ki_r[s], G + g)

        def v_map(b, g, s, qi_r, ki_r):
            return (b, ki_r[s], 2 * G + g)

        return pl.pallas_call(
            kernel,
            out_shape=jax.ShapeDtypeStruct((B, S, d_model), out_dtype),
            grid_spec=pltpu.PrefetchScalarGridSpec(
                num_scalar_prefetch=2,
                grid=(B, G, n_steps),
                in_specs=[pl.BlockSpec((None, tq, width), q_map),
                          _kv_block_spec((None, tkv, width), k_map),
                          _kv_block_spec((None, tkv, width), v_map)],
                out_specs=pl.BlockSpec((None, tq, width), q_map),
                scratch_shapes=scratch),
            compiler_params=params,
            cost_estimate=cost,
        )(qi_arr, ki_arr, qkv, qkv, qkv)

    # Fallback for head dims that cannot be made lane-dense: explicit
    # (B, H, S, d_k) layout, same trapezoid grid and kernel (hpb = 1).
    def split(z):
        return z.reshape(B, S, num_heads, d_k).transpose(0, 2, 1, 3)

    q = split(qkv[:, :, :d_model])
    k = split(qkv[:, :, d_model:2 * d_model])
    v = split(qkv[:, :, 2 * d_model:])

    kernel = _make_flash_kernel(1, d_k, tq, tkv, scale, compute_dtype)
    scratch = [pltpu.VMEM((tq, d_k), compute_dtype),
               pltpu.VMEM((tq, 1), jnp.float32),
               pltpu.VMEM((tq, 1), jnp.float32),
               pltpu.VMEM((tq, d_k), jnp.float32)]

    def q_map(b, h, s, qi_r, ki_r):
        return (b, h, qi_r[s], 0)

    def kv_map(b, h, s, qi_r, ki_r):
        return (b, h, ki_r[s], 0)

    out = pl.pallas_call(
        kernel,
        out_shape=jax.ShapeDtypeStruct((B, num_heads, S, d_k), out_dtype),
        grid_spec=pltpu.PrefetchScalarGridSpec(
            num_scalar_prefetch=2,
            grid=(B, num_heads, n_steps),
            in_specs=[pl.BlockSpec((None, None, tq, d_k), q_map),
                      _kv_block_spec((None, None, tkv, d_k), kv_map),
                      _kv_block_spec((None, None, tkv, d_k), kv_map)],
            out_specs=pl.BlockSpec((None, None, tq, d_k), q_map),
            scratch_shapes=scratch),
        compiler_params=params,
        cost_estimate=cost,
    )(qi_arr, ki_arr, q, k, v)
    return out.transpose(0, 2, 1, 3).reshape(B, S, d_model)


# ---------------------------------------------------------------------------
# MultiHeadAttention forward (use_rope=False)
# ---------------------------------------------------------------------------
def pack_mha_params(params, *, mxu_dtype=jnp.bfloat16):
    """One-time weight packing (do this OUTSIDE the forward pass): fused and
    pre-transposed QKV weight plus the output-projection weight, in MXU dtype."""
    w_qkv_t = jnp.concatenate([params["wq"], params["wk"], params["wv"]],
                              axis=0).T.astype(mxu_dtype)     # (d_model, 3*d_model)
    wo_t = params["wo"].T.astype(mxu_dtype)                   # (d_model, d_model)
    return {"w_qkv_t": w_qkv_t, "wo_t": wo_t}


def multi_head_attention(x, packed, num_heads, *, tq=256, tkv=512,
                         compute_dtype=jnp.bfloat16):
    """x: (B, S, d_model); packed: output of pack_mha_params."""
    # TODO(synk): use_rope=True branch (RotaryPositionalEmbedding) not implemented.
    B, S, d_model = x.shape
    assert d_model % num_heads == 0
    assert packed["w_qkv_t"].shape == (d_model, 3 * d_model)
    qkv = matmul(x.reshape(B * S, d_model), packed["w_qkv_t"],
                 out_dtype=compute_dtype, mxu_dtype=compute_dtype,
                 ).reshape(B, S, 3 * d_model)
    attn = causal_flash_attention(qkv, num_heads, d_model, tq=tq, tkv=tkv,
                                  compute_dtype=compute_dtype,
                                  out_dtype=compute_dtype)     # (B, S, d_model)
    return matmul(attn.reshape(B * S, d_model), packed["wo_t"],
                  out_dtype=x.dtype, mxu_dtype=compute_dtype,
                  ).reshape(B, S, d_model)


# ---------------------------------------------------------------------------
# Pure-JAX f32 reference for correctness check
# ---------------------------------------------------------------------------
def reference_mha(x, params, num_heads):
    B, S, d_model = x.shape
    d_k = d_model // num_heads
    Q = x @ params["wq"].T
    K = x @ params["wk"].T
    V = x @ params["wv"].T
    sh = lambda t: t.reshape(B, S, num_heads, d_k).transpose(0, 2, 1, 3)
    q, k, v = sh(Q), sh(K), sh(V)
    logits = jnp.einsum("bhqd,bhkd->bhqk", q, k) / jnp.sqrt(jnp.float32(d_k))
    mask = jnp.tril(jnp.ones((S, S), dtype=bool))
    logits = logits - jnp.where(mask, 0.0, 1.0e10)
    logits = logits - jnp.max(logits, axis=-1, keepdims=True)
    e = jnp.exp(logits)
    p = e / jnp.sum(e, axis=-1, keepdims=True)
    o = jnp.einsum("bhqk,bhkd->bhqd", p, v)
    merged = o.transpose(0, 2, 1, 3).reshape(B, S, d_model)
    return merged @ params["wo"].T


if __name__ == "__main__":
    def make_inputs(key, B, S, d_model):
        kx, kq, kk, kv, ko = jax.random.split(key, 5)
        x = jax.random.normal(kx, (B, S, d_model), dtype=jnp.float32)
        scale = 1.0 / jnp.sqrt(jnp.float32(d_model))
        params = {
            "wq": jax.random.normal(kq, (d_model, d_model), jnp.float32) * scale,
            "wk": jax.random.normal(kk, (d_model, d_model), jnp.float32) * scale,
            "wv": jax.random.normal(kv, (d_model, d_model), jnp.float32) * scale,
            "wo": jax.random.normal(ko, (d_model, d_model), jnp.float32) * scale,
        }
        return x, params

    def check(out, ref, tag, tol=5e-2):
        # bf16 MXU feeds with f32 accumulation -> bf16-appropriate tolerance.
        assert out.shape == ref.shape, tag
        err = float(jnp.max(jnp.abs(out.astype(jnp.float32) - ref))
                    / jnp.maximum(jnp.max(jnp.abs(ref)), 1e-6))
        assert err < tol, f"{tag}: relative max error {err}"

    root = jax.random.PRNGKey(0)
    k1, k2, k3 = jax.random.split(root, 3)

    # Case 1: d_k = 128 -> lane-dense fast path (1 head per grid step).
    x1, p1 = make_inputs(k1, B=2, S=128, d_model=256)
    packed1 = pack_mha_params(p1)
    out1 = jax.block_until_ready(multi_head_attention(x1, packed1, num_heads=2))
    check(out1, reference_mha(x1, p1, num_heads=2), "fast path d_k=128")

    # Case 2: d_k = 64 -> grouped-head lane-dense path (2 heads per grid step).
    x2, p2 = make_inputs(k2, B=2, S=64, d_model=256)
    packed2 = pack_mha_params(p2)
    out2 = jax.block_until_ready(multi_head_attention(x2, packed2, num_heads=4))
    check(out2, reference_mha(x2, p2, num_heads=4), "grouped path d_k=64")

    # Case 3: tiny d_k = 8 -> generic per-head fallback layout.
    x3, p3 = make_inputs(k3, B=2, S=8, d_model=32)
    packed3 = pack_mha_params(p3)
    out3 = jax.block_until_ready(multi_head_attention(x3, packed3, num_heads=4))
    check(out3, reference_mha(x3, p3, num_heads=4), "fallback path d_k=8")

    print("KERNEL_OK")
</pallas_src>

<mosaic_0001>
module attributes {stable_mosaic.version = 11 : i64} {
  func.func @_matmul_kernel(%arg0: i32, %arg1: i32, %arg2: i32, %arg3: memref<256x256xf32, #tpu.memory_space<vmem>>, %arg4: memref<256x384xbf16, #tpu.memory_space<vmem>>, %arg5: memref<256x384xbf16, #tpu.memory_space<vmem>>, %arg6: memref<256x384xf32, #tpu.memory_space<vmem>>) attributes {dimension_semantics = [#tpu.dimension_semantics<parallel>, #tpu.dimension_semantics<parallel>, #tpu.dimension_semantics<arbitrary>], iteration_bounds = array<i64: 1, 2, 1>, scalar_prefetch = 0 : i64, scratch_operands = 1 : i64, tpu.core_type = #tpu.core_type<tc>, window_params = [{transform_indices = @transform_0, window_bounds = array<i64: 256, 256>}, {transform_indices = @transform_1, window_bounds = array<i64: 256, 384>}, {transform_indices = @transform_2, window_bounds = array<i64: 256, 384>}]} {
    %c0_i32 = arith.constant 0 : i32
    %0 = arith.cmpi eq, %arg2, %c0_i32 : i32
    %1 = arith.extui %0 : i1 to i32
    %c0_i32_0 = arith.constant 0 : i32
    %2 = arith.cmpi ne, %1, %c0_i32_0 : i32
    scf.if %2 {
      %cst_10 = arith.constant 0.000000e+00 : f32
      %13 = vector.broadcast %cst_10 : f32 to vector<256x384xf32>
      %c0_11 = arith.constant 0 : index
      %c0_12 = arith.constant 0 : index
      %14 = vector.load %arg6[%c0_11, %c0_12] : memref<256x384xf32, #tpu.memory_space<vmem>>, vector<256x384xf32>
      tpu.vector_store %arg6[%c0_11, %c0_12], %13 {strides = array<i32>} : memref<256x384xf32, #tpu.memory_space<vmem>>, vector<256x384xf32>,
    } else {
    }
    %c0 = arith.constant 0 : index
    %c0_1 = arith.constant 0 : index
    %3 = vector.load %arg6[%c0, %c0_1] : memref<256x384xf32, #tpu.memory_space<vmem>>, vector<256x384xf32>
    %c0_2 = arith.constant 0 : index
    %c0_3 = arith.constant 0 : index
    %4 = vector.load %arg3[%c0_2, %c0_3] : memref<256x256xf32, #tpu.memory_space<vmem>>, vector<256x256xf32>
    %5 = arith.truncf %4 : vector<256x256xf32> to vector<256x256xbf16>
    %c0_4 = arith.constant 0 : index
    %c0_5 = arith.constant 0 : index
    %6 = vector.load %arg4[%c0_4, %c0_5] : memref<256x384xbf16, #tpu.memory_space<vmem>>, vector<256x384xbf16>
    %cst = arith.constant dense<0.000000e+00> : vector<256x384xf32>
    %7 = tpu.matmul %5, %6, %cst {dimension_numbers = #tpu.dot_dimension_numbers<[1], [0], [0], [1], [0, 0, 1, 1], [], []>} : vector<256x256xbf16>, vector<256x384xbf16>, vector<256x384xf32> -> vector<256x384xf32>
    %8 = arith.addf %3, %7 : vector<256x384xf32>
    %c0_6 = arith.constant 0 : index
    %c0_7 = arith.constant 0 : index
    %9 = vector.load %arg6[%c0_6, %c0_7] : memref<256x384xf32, #tpu.memory_space<vmem>>, vector<256x384xf32>
    tpu.vector_store %arg6[%c0_6, %c0_7], %8 {strides = array<i32>} : memref<256x384xf32, #tpu.memory_space<vmem>>, vector<256x384xf32>,
    %c0_i32_8 = arith.constant 0 : i32
    %10 = arith.cmpi eq, %arg2, %c0_i32_8 : i32
    %11 = arith.extui %10 : i1 to i32
    %c0_i32_9 = arith.constant 0 : i32
    %12 = arith.cmpi ne, %11, %c0_i32_9 : i32
    scf.if %12 {
      %c0_10 = arith.constant 0 : index
      %c0_11 = arith.constant 0 : index
      %13 = vector.load %arg6[%c0_10, %c0_11] : memref<256x384xf32, #tpu.memory_space<vmem>>, vector<256x384xf32>
      %14 = arith.truncf %13 : vector<256x384xf32> to vector<256x384xbf16>
      %c0_12 = arith.constant 0 : index
      %c0_13 = arith.constant 0 : index
      %15 = vector.load %arg5[%c0_12, %c0_13] : memref<256x384xbf16, #tpu.memory_space<vmem>>, vector<256x384xbf16>
      tpu.vector_store %arg5[%c0_12, %c0_13], %14 {strides = array<i32>} : memref<256x384xbf16, #tpu.memory_space<vmem>>, vector<256x384xbf16>,
    } else {
    }
    return
  }
  func.func @transform_0(%arg0: i32, %arg1: i32, %arg2: i32) -> (i32, i32) {
    %c0_i32 = arith.constant 0 : i32
    return %arg0, %arg2 : i32, i32
  }
  func.func @transform_1(%arg0: i32, %arg1: i32, %arg2: i32) -> (i32, i32) {
    %c0_i32 = arith.constant 0 : i32
    return %arg2, %arg1 : i32, i32
  }
  func.func @transform_2(%arg0: i32, %arg1: i32, %arg2: i32) -> (i32, i32) {
    %c0_i32 = arith.constant 0 : i32
    return %arg0, %arg1 : i32, i32
  }
}

</mosaic_0001>

<llo_original>
// kernel: tpu_custom_call.1
$region0: #{tpu_custom_call.1}
  #allocation0 [shape = 'u32[]', space=smem, size = 0x4, offset = 0x4, fixed_abs, tag = 'smem constant byte address 0x4 - core index']
  #allocation1 [shape = 'u32[144,128]{1,0:T(1,128)}', space=vmem, size = 0x12000, scoped, tag = 'internal scratch']
  #allocation2 [shape = 'f32[256,384]{1,0:T(8,128)}', space=vmem, size = 0x60000, scoped, tag = 'scratch operand']
  %s0 = inlined_call_operand.hbm [shape: f32[256,256], index: 0, kind: input, shape index: {}]
  %s1 = inlined_call_operand.hbm [shape: bf16[256,768], index: 1, kind: input, shape index: {}]
  %s2 = inlined_call_operand.hbm [shape: bf16[256,768], index: 2, kind: output, shape index: {}]
  %s3 = sld [smem:[#allocation0]]
  $region57: #{tpu_custom_call.1} parent=0
    _
  %s5 = ssub.s32 1, %s3
  %s6 = scalar_select 0, %s5, %s3
  $region1: #{tpu_custom_call.1} parent=0
    #allocation3 [shape = 'u8[262144]{0}', space=vmem, size = 0x40000, scoped, tag = 'input window, operand 0, single buffered']
    #allocation4 [shape = 's32[2]{0}', space=sflag, size = 0x8, scoped, tag = 'scoped memory for tpu_custom_call.1']
    #allocation5 [shape = 's32[2]{0}', space=sflag, size = 0x8, scoped, tag = 'scoped memory for tpu_custom_call.1']
    #allocation6 [shape = 'u8[393216]{0}', space=vmem, size = 0x60000, scoped, tag = 'input window, operand 1']
    #allocation7 [shape = 's32[2]{0}', space=sflag, size = 0x8, scoped, tag = 'scoped memory for tpu_custom_call.1']
    #allocation8 [shape = 'u8[393216]{0}', space=vmem, size = 0x60000, scoped, tag = 'output window, operand 0']
    %7 = vsyncpa [#allocation4], 0
    %8 = vsyncpa [#allocation7], 0
    %s9 = scalar_lea.sflag [#allocation7], 1
    %10 = vsyncpa %s9, 0
    %11 = vsyncpa [#allocation5], 0
    %s12 = scalar_lea.sflag [#allocation5], 1
    %13 = vsyncpa %s12, 0
    loop: start=0, step=1, limit=4
    $region2: #{tpu_custom_call.1} parent=1 // loop_pre_header
      _
    $region3: #{tpu_custom_call.1} parent=1 // loop_header
      %s15 = sphi 0, %s19
      %p16 = scmp.ge.s32.totalorder %s15, 4
      %s22 = sphi 0, %s41
      %s23 = sphi 0, %s37
      %s24 = sphi 0, %s33
      %s25 = sphi 0, %s22
      %s26 = sphi 0, %s23
      %s27 = sphi 0, %s24
      %s28 = sphi 0, %s25
      %s29 = sphi 0, %s26
      %s30 = sphi 0, %s27
      %s46 = sphi 0, %s48
      %s49 = sphi 0, %s46
      %s50 = sphi 0, %s49
      %s66 = sphi 0, %s50
      %s74 = sphi 0, %s76
      %s77 = sphi 0, %s74
      %s78 = sphi 0, %s77
      %s94 = sphi 0, %s78
      %s102 = sphi 0, %s104
      %s105 = sphi 0, %s102
      %s106 = sphi 0, %s105
      %s122 = sphi 0, %s106
    $region4: #{tpu_custom_call.1} parent=1 // loop_header_branch
      %18 = sbr.rel (%p16) target = $region8
    $region5: #{tpu_custom_call.1} parent=1 // loop_body
      %s20 = ssub.s32 %s15, 1
      %s21 = ssub.s32 %s15, 2
      %s31 = sadd.s32 1, %s24
      %p32 = scmp.ge.s32.totalorder %s31, 1
      %s33 = scalar_select %p32, 0, %s31
      %s34 = sadd.s32 1, %s23
      %s35 = scalar_select %p32, %s34, %s23
      %p36 = scmp.ge.s32.totalorder %s35, 2
      %s37 = scalar_select %p36, 0, %s35
      %s38 = sadd.s32 1, %s22
      %s39 = scalar_select %p36, %s38, %s22
      %p40 = scmp.ge.s32.totalorder %s39, 1
      %s41 = scalar_select %p40, 0, %s39
      %s42 = ssub.s32 %s22, %s41
      %s43 = ssub.s32 %s24, %s33
      %s44 = sor.u32 %s42, %s43
      %p45 = scmp.eq.s32.totalorder %s44, 0
      %s47 = sadd.s32 %s46, 1
      %s48 = scalar_select %p45, %s46, %s47
      %p51 = pneg %p45
      %p52 = scmp.eq.s32.totalorder %s15, 1
      %p53 = por %p51, %p52
      %p54 = scmp.ne.s32.totalorder %s46, %s49
      %p55 = scmp.eq.s32.totalorder %s15, 0
      %p56 = por %p54, %p55
      %p57 = scmp.ne.s32.totalorder %s46, %s49
      %p58 = scmp.eq.s32.totalorder %s20, 1
      %p59 = por %p57, %p58
      %p60 = scmp.ne.s32.totalorder %s49, %s50
      %p61 = scmp.eq.s32.totalorder %s20, 0
      %p62 = por %p60, %p61
      %p63 = scmp.ne.s32.totalorder %s49, %s50
      %p64 = scmp.eq.s32.totalorder %s21, 1
      %p65 = por %p63, %p64
      %p67 = scmp.ne.s32.totalorder %s50, %s66
      %p68 = scmp.eq.s32.totalorder %s21, 0
      %p69 = por %p67, %p68
      %s70 = ssub.s32 %s24, %s33
      %s71 = ssub.s32 %s23, %s37
      %s72 = sor.u32 %s70, %s71
      %p73 = scmp.eq.s32.totalorder %s72, 0
      %s75 = sadd.s32 %s74, 1
      %s76 = scalar_select %p73, %s74, %s75
      %p79 = pneg %p73
      %p80 = scmp.eq.s32.totalorder %s15, 1
      %p81 = por %p79, %p80
      %p82 = scmp.ne.s32.totalorder %s74, %s77
      %p83 = scmp.eq.s32.totalorder %s15, 0
      %p84 = por %p82, %p83
      %p85 = scmp.ne.s32.totalorder %s74, %s77
      %p86 = scmp.eq.s32.totalorder %s20, 1
      %p87 = por %p85, %p86
      %p88 = scmp.ne.s32.totalorder %s77, %s78
      %p89 = scmp.eq.s32.totalorder %s20, 0
      %p90 = por %p88, %p89
      %p91 = scmp.ne.s32.totalorder %s77, %s78
      %p92 = scmp.eq.s32.totalorder %s21, 1
      %p93 = por %p91, %p92
      %p95 = scmp.ne.s32.totalorder %s78, %s94
      %p96 = scmp.eq.s32.totalorder %s21, 0
      %p97 = por %p95, %p96
      %s98 = ssub.s32 %s22, %s41
      %s99 = ssub.s32 %s23, %s37
      %s100 = sor.u32 %s98, %s99
      %p101 = scmp.eq.s32.totalorder %s100, 0
      %s103 = sadd.s32 %s102, 1
      %s104 = scalar_select %p101, %s102, %s103
      %p107 = pneg %p101
      %p108 = scmp.eq.s32.totalorder %s15, 1
      %p109 = por %p107, %p108
      %p110 = scmp.ne.s32.totalorder %s102, %s105
      %p111 = scmp.eq.s32.totalorder %s15, 0
      %p112 = por %p110, %p111
      %p113 = scmp.ne.s32.totalorder %s102, %s105
      %p114 = scmp.eq.s32.totalorder %s20, 1
      %p115 = por %p113, %p114
      %p116 = scmp.ne.s32.totalorder %s105, %s106
      %p117 = scmp.eq.s32.totalorder %s20, 0
      %p118 = por %p116, %p117
      %p119 = scmp.ne.s32.totalorder %s105, %s106
      %p120 = scmp.eq.s32.totalorder %s21, 1
      %p121 = por %p119, %p120
      %p123 = scmp.ne.s32.totalorder %s106, %s122
      %p124 = scmp.eq.s32.totalorder %s21, 0
      %p125 = por %p123, %p124
      %p126 = scmp.le.s32.totalorder 1, %s15
      %p127 = scmp.lt.s32.totalorder %s15, 3
      %p128 = pnand %p126, %p127
      %p129 = pneg %p128
      // Predicated region
      $region9: #{tpu_custom_call.1} parent=5 // pred_check
        _
      $region10: #{tpu_custom_call.1} parent=5 // pred_check_branch
        %131 = sbr.rel (%p128) target = $region12
      $region11: #{tpu_custom_call.1} parent=5 // pred_region
        %s132 = ssub.s32 %s15, 1
        // Predicated region
        $region13: #{tpu_custom_call.1} parent=11 // pred_check
          %p133 = pneg %p62
        $region14: #{tpu_custom_call.1} parent=11 // pred_check_branch
          %135 = sbr.rel (%p133) target = $region16
        $region15: #{tpu_custom_call.1} parent=11 // pred_region
          %s136 = smul.u32 32, %s25
          %s137 = smul.u32 2, %s27
          %s139 = ssub.s32 8192, 8192
          %140 = vsyncadd [#allocation4], %s139
          %s141 = smul.addr %s136, 2
          %s142 = sadd.s32 %s137, %s141
          %s143 = smul.addr %s142, 128
          %s144 = scalar_lea.hbm %s0, %s143
          %s145 = sshll.u32 [#allocation3], 4
          %s146 = int_to_ptr.vmem [resolvable:$true] %s145
          %151 = dma.hbm_to_vmem [thread:$0]  %s144, 8192, %s146, [#allocation4], 256, 256, 16
        $region16: #{tpu_custom_call.1} parent=11 // pred_fallthru
          _
      $region12: #{tpu_custom_call.1} parent=5 // pred_fallthru
        _
      %p152 = scmp.lt.s32.totalorder %s15, 2
      // Predicated region
      $region17: #{tpu_custom_call.1} parent=5 // pred_check
        %p153 = pneg %p152
      $region18: #{tpu_custom_call.1} parent=5 // pred_check_branch
        %155 = sbr.rel (%p153) target = $region20
      $region19: #{tpu_custom_call.1} parent=5 // pred_region
        // Predicated region
        $region21: #{tpu_custom_call.1} parent=19 // pred_check
          %p156 = pneg %p84
        $region22: #{tpu_custom_call.1} parent=19 // pred_check_branch
          %158 = sbr.rel (%p156) target = $region24
        $region23: #{tpu_custom_call.1} parent=19 // pred_region
          %s159 = sand.u32 %s74, 1
          %s160 = scalar_lea.sflag [#allocation7], %s159
          %s161 = sand.u32 %s74, 1
          %s162 = smul.addr %s161, 384
          %s163 = scalar_lea.vmem [#allocation6], %s162
          %s164 = smul.u32 32, %s24
          %s165 = smul.u32 3, %s23
          %s167 = ssub.s32 6144, 6144
          %168 = vsyncadd %s160, %s167
          %s169 = smul.addr %s164, 6
          %s170 = sadd.s32 %s165, %s169
          %s171 = smul.addr %s170, 64
          %s172 = scalar_lea.hbm %s1, %s171
          %s173 = sshll.u32 %s163, 4
          %s174 = int_to_ptr.vmem [resolvable:$true] %s173
          %179 = dma.hbm_to_vmem [thread:$0]  %s172, 6144, %s174, %s160, 384, 192, 12
        $region24: #{tpu_custom_call.1} parent=19 // pred_fallthru
          _
      $region20: #{tpu_custom_call.1} parent=5 // pred_fallthru
        _
      %p180 = scmp.le.s32.totalorder 1, %s15
      %p181 = scmp.lt.s32.totalorder %s15, 3
      %p182 = pnand %p180, %p181
      %p183 = pneg %p182
      // Predicated region
      $region25: #{tpu_custom_call.1} parent=5 // pred_check
        _
      $region26: #{tpu_custom_call.1} parent=5 // pred_check_branch
        %185 = sbr.rel (%p182) target = $region28
      $region27: #{tpu_custom_call.1} parent=5 // pred_region
        %s186 = ssub.s32 %s15, 1
        // Predicated region
        $region29: #{tpu_custom_call.1} parent=27 // pred_check
          %p187 = pneg %p62
        $region30: #{tpu_custom_call.1} parent=27 // pred_check_branch
          %189 = sbr.rel (%p187) target = $region32
        $region31: #{tpu_custom_call.1} parent=27 // pred_region
          %190 = dma.done [#allocation4], 8192
        $region32: #{tpu_custom_call.1} parent=27 // pred_fallthru
          _
        %s191 = sand.u32 %s77, 1
        %s192 = scalar_lea.sflag [#allocation7], %s191
        %s193 = sand.u32 %s77, 1
        %s194 = smul.addr %s193, 384
        %s195 = scalar_lea.vmem [#allocation6], %s194
        // Predicated region
        $region33: #{tpu_custom_call.1} parent=27 // pred_check
          %p196 = pneg %p90
        $region34: #{tpu_custom_call.1} parent=27 // pred_check_branch
          %198 = sbr.rel (%p196) target = $region36
        $region35: #{tpu_custom_call.1} parent=27 // pred_region
          %199 = dma.done %s192, 6144
        $region36: #{tpu_custom_call.1} parent=27 // pred_fallthru
          _
        %p200 = pneg %p62
        %p201 = pneg %p59
        %s202 = sand.u32 %s77, 1
        %s203 = scalar_lea.sflag [#allocation7], %s202
        %s204 = sand.u32 %s77, 1
        %s205 = smul.addr %s204, 384
        %s206 = scalar_lea.vmem [#allocation6], %s205
        %p207 = pneg %p90
        %p208 = pneg %p87
        %p209 = pneg %p118
        %p210 = pneg %p115
        %s211 = sand.u32 %s105, 1
        %s212 = scalar_lea.sflag [#allocation5], %s211
        %s213 = sand.u32 %s105, 1
        %s214 = smul.addr %s213, 384
        %s215 = scalar_lea.vmem [#allocation8], %s214
        %s216 = smul.u32 32, %s25
        %s217 = smul.u32 2, %s27
        %s218 = smul.u32 32, %s27
        %s219 = smul.u32 3, %s26
        %s220 = smul.u32 32, %s25
        %s221 = smul.u32 3, %s26
        %p223 = scmp.eq.s32.totalorder %s27, 0
        // Predicated region
        $region37: #{tpu_custom_call.1} parent=27 // pred_check
          %p224 = pneg %p223
        $region38: #{tpu_custom_call.1} parent=27 // pred_check_branch
          %226 = sbr.rel (%p224) target = $region40
        $region39: #{tpu_custom_call.1} parent=27 // pred_region
          %227 = vst [vmem:[#allocation2] sm:$0xff] 0.0
          %228 = vst [vmem:[#allocation2 + $0x8] sm:$0xff] 0.0
          %229 = vst [vmem:[#allocation2 + $0x10] sm:$0xff] 0.0
          %230 = vst [vmem:[#allocation2 + $0x18] sm:$0xff] 0.0
          %231 = vst [vmem:[#allocation2 + $0x20] sm:$0xff] 0.0
          %232 = vst [vmem:[#allocation2 + $0x28] sm:$0xff] 0.0
          %233 = vst [vmem:[#allocation2 + $0x30] sm:$0xff] 0.0
          %234 = vst [vmem:[#allocation2 + $0x38] sm:$0xff] 0.0
          %235 = vst [vmem:[#allocation2 + $0x40] sm:$0xff] 0.0
          %236 = vst [vmem:[#allocation2 + $0x48] sm:$0xff] 0.0
          %237 = vst [vmem:[#allocation2 + $0x50] sm:$0xff] 0.0
          %238 = vst [vmem:[#allocation2 + $0x58] sm:$0xff] 0.0
          %239 = vst [vmem:[#allocation2 + $0x60] sm:$0xff] 0.0
          %240 = vst [vmem:[#allocation2 + $0x68] sm:$0xff] 0.0
          %241 = vst [vmem:[#allocation2 + $0x70] sm:$0xff] 0.0
          %242 = vst [vmem:[#allocation2 + $0x78] sm:$0xff] 0.0
          %243 = vst [vmem:[#allocation2 + $0x80] sm:$0xff] 0.0
          %244 = vst [vmem:[#allocation2 + $0x88] sm:$0xff] 0.0
          %245 = vst [vmem:[#allocation2 + $0x90] sm:$0xff] 0.0
          %246 = vst [vmem:[#allocation2 + $0x98] sm:$0xff] 0.0
          %247 = vst [vmem:[#allocation2 + $0xa0] sm:$0xff] 0.0
          %248 = vst [vmem:[#allocation2 + $0xa8] sm:$0xff] 0.0
          %249 = vst [vmem:[#allocation2 + $0xb0] sm:$0xff] 0.0
          %250 = vst [vmem:[#allocation2 + $0xb8] sm:$0xff] 0.0
          %251 = vst [vmem:[#allocation2 + $0xc0] sm:$0xff] 0.0
          %252 = vst [vmem:[#allocation2 + $0xc8] sm:$0xff] 0.0
          %253 = vst [vmem:[#allocation2 + $0xd0] sm:$0xff] 0.0
          %254 = vst [vmem:[#allocation2 + $0xd8] sm:$0xff] 0.0
          %255 = vst [vmem:[#allocation2 + $0xe0] sm:$0xff] 0.0
          %256 = vst [vmem:[#allocation2 + $0xe8] sm:$0xff] 0.0
          %257 = vst [vmem:[#allocation2 + $0xf0] sm:$0xff] 0.0
          %258 = vst [vmem:[#allocation2 + $0xf8] sm:$0xff] 0.0
          %259 = vst [vmem:[#allocation2 + $0x100] sm:$0xff] 0.0
          %260 = vst [vmem:[#allocation2 + $0x108] sm:$0xff] 0.0
          %261 = vst [vmem:[#allocation2 + $0x110] sm:$0xff] 0.0
          %262 = vst [vmem:[#allocation2 + $0x118] sm:$0xff] 0.0
          %263 = vst [vmem:[#allocation2 + $0x120] sm:$0xff] 0.0
          %264 = vst [vmem:[#allocation2 + $0x128] sm:$0xff] 0.0
          %265 = vst [vmem:[#allocation2 + $0x130] sm:$0xff] 0.0
          %266 = vst [vmem:[#allocation2 + $0x138] sm:$0xff] 0.0
          %267 = vst [vmem:[#allocation2 + $0x140] sm:$0xff] 0.0
          %268 = vst [vmem:[#allocation2 + $0x148] sm:$0xff] 0.0
          %269 = vst [vmem:[#allocation2 + $0x150] sm:$0xff] 0.0
          %270 = vst [vmem:[#allocation2 + $0x158] sm:$0xff] 0.0
          %271 = vst [vmem:[#allocation2 + $0x160] sm:$0xff] 0.0
          %272 = vst [vmem:[#allocation2 + $0x168] sm:$0xff] 0.0
          %273 = vst [vmem:[#allocation2 + $0x170] sm:$0xff] 0.0
          %274 = vst [vmem:[#allocation2 + $0x178] sm:$0xff] 0.0
          %275 = vst [vmem:[#allocation2 + $0x180] sm:$0xff] 0.0
          %276 = vst [vmem:[#allocation2 + $0x188] sm:$0xff] 0.0
          %277 = vst [vmem:[#allocation2 + $0x190] sm:$0xff] 0.0
          %278 = vst [vmem:[#allocation2 + $0x198] sm:$0xff] 0.0
          %279 = vst [vmem:[#allocation2 + $0x1a0] sm:$0xff] 0.0
          %280 = vst [vmem:[#allocation2 + $0x1a8] sm:$0xff] 0.0
          %281 = vst [vmem:[#allocation2 + $0x1b0] sm:$0xff] 0.0
          %282 = vst [vmem:[#allocation2 + $0x1b8] sm:$0xff] 0.0
          %283 = vst [vmem:[#allocation2 + $0x1c0] sm:$0xff] 0.0
          %284 = vst [vmem:[#allocation2 + $0x1c8] sm:$0xff] 0.0
          %285 = vst [vmem:[#allocation2 + $0x1d0] sm:$0xff] 0.0
          %286 = vst [vmem:[#allocation2 + $0x1d8] sm:$0xff] 0.0
          %287 = vst [vmem:[#allocation2 + $0x1e0] sm:$0xff] 0.0
          %288 = vst [vmem:[#allocation2 + $0x1e8] sm:$0xff] 0.0
          %289 = vst [vmem:[#allocation2 + $0x1f0] sm:$0xff] 0.0
          %290 = vst [vmem:[#allocation2 + $0x1f8] sm:$0xff] 0.0
          %291 = vst [vmem:[#allocation2 + $0x200] sm:$0xff] 0.0
          %292 = vst [vmem:[#allocation2 + $0x208] sm:$0xff] 0.0
          %293 = vst [vmem:[#allocation2 + $0x210] sm:$0xff] 0.0
          %294 = vst [vmem:[#allocation2 + $0x218] sm:$0xff] 0.0
          %295 = vst [vmem:[#allocation2 + $0x220] sm:$0xff] 0.0
          %296 = vst [vmem:[#allocation2 + $0x228] sm:$0xff] 0.0
          %297 = vst [vmem:[#allocation2 + $0x230] sm:$0xff] 0.0
          %298 = vst [vmem:[#allocation2 + $0x238] sm:$0xff] 0.0
          %299 = vst [vmem:[#allocation2 + $0x240] sm:$0xff] 0.0
          %300 = vst [vmem:[#allocation2 + $0x248] sm:$0xff] 0.0
          %301 = vst [vmem:[#allocation2 + $0x250] sm:$0xff] 0.0
          %302 = vst [vmem:[#allocation2 + $0x258] sm:$0xff] 0.0
          %303 = vst [vmem:[#allocation2 + $0x260] sm:$0xff] 0.0
          %304 = vst [vmem:[#allocation2 + $0x268] sm:$0xff] 0.0
          %305 = vst [vmem:[#allocation2 + $0x270] sm:$0xff] 0.0
          %306 = vst [vmem:[#allocation2 + $0x278] sm:$0xff] 0.0
          %307 = vst [vmem:[#allocation2 + $0x280] sm:$0xff] 0.0
          %308 = vst [vmem:[#allocation2 + $0x288] sm:$0xff] 0.0
          %309 = vst [vmem:[#allocation2 + $0x290] sm:$0xff] 0.0
          %310 = vst [vmem:[#allocation2 + $0x298] sm:$0xff] 0.0
          %311 = vst [vmem:[#allocation2 + $0x2a0] sm:$0xff] 0.0
          %312 = vst [vmem:[#allocation2 + $0x2a8] sm:$0xff] 0.0
          %313 = vst [vmem:[#allocation2 + $0x2b0] sm:$0xff] 0.0
          %314 = vst [vmem:[#allocation2 + $0x2b8] sm:$0xff] 0.0
          %315 = vst [vmem:[#allocation2 + $0x2c0] sm:$0xff] 0.0
          %316 = vst [vmem:[#allocation2 + $0x2c8] sm:$0xff] 0.0
          %317 = vst [vmem:[#allocation2 + $0x2d0] sm:$0xff] 0.0
          %318 = vst [vmem:[#allocation2 + $0x2d8] sm:$0xff] 0.0
          %319 = vst [vmem:[#allocation2 + $0x2e0] sm:$0xff] 0.0
          %320 = vst [vmem:[#allocation2 + $0x2e8] sm:$0xff] 0.0
          %321 = vst [vmem:[#allocation2 + $0x2f0] sm:$0xff] 0.0
          %322 = vst [vmem:[#allocation2 + $0x2f8] sm:$0xff] 0.0
        $region40: #{tpu_custom_call.1} parent=27 // pred_fallthru
          _
        %v323 = vld [vmem:[#allocation2] sm:$0xff]
        %v324 = vld [vmem:[#allocation2 + $0x8] sm:$0xff]
        %v325 = vld [vmem:[#allocation2 + $0x10] sm:$0xff]
        %v326 = vld [vmem:[#allocation2 + $0x18] sm:$0xff]
        %v327 = vld [vmem:[#allocation2 + $0x20] sm:$0xff]
        %v328 = vld [vmem:[#allocation2 + $0x28] sm:$0xff]
        %v329 = vld [vmem:[#allocation2 + $0x30] sm:$0xff]
        %v330 = vld [vmem:[#allocation2 + $0x38] sm:$0xff]
        %v331 = vld [vmem:[#allocation2 + $0x40] sm:$0xff]
        %v332 = vld [vmem:[#allocation2 + $0x48] sm:$0xff]
        %v333 = vld [vmem:[#allocation2 + $0x50] sm:$0xff]
        %v334 = vld [vmem:[#allocation2 + $0x58] sm:$0xff]
        %v335 = vld [vmem:[#allocation2 + $0x60] sm:$0xff]
        %v336 = vld [vmem:[#allocation2 + $0x68] sm:$0xff]
        %v337 = vld [vmem:[#allocation2 + $0x70] sm:$0xff]
        %v338 = vld [vmem:[#allocation2 + $0x78] sm:$0xff]
        %v339 = vld [vmem:[#allocation2 + $0x80] sm:$0xff]
        %v340 = vld [vmem:[#allocation2 + $0x88] sm:$0xff]
        %v341 = vld [vmem:[#allocation2 + $0x90] sm:$0xff]
        %v342 = vld [vmem:[#allocation2 + $0x98] sm:$0xff]
        %v343 = vld [vmem:[#allocation2 + $0xa0] sm:$0xff]
        %v344 = vld [vmem:[#allocation2 + $0xa8] sm:$0xff]
        %v345 = vld [vmem:[#allocation2 + $0xb0] sm:$0xff]
        %v346 = vld [vmem:[#allocation2 + $0xb8] sm:$0xff]
        %v347 = vld [vmem:[#allocation2 + $0xc0] sm:$0xff]
        %v348 = vld [vmem:[#allocation2 + $0xc8] sm:$0xff]
        %v349 = vld [vmem:[#allocation2 + $0xd0] sm:$0xff]
        %v350 = vld [vmem:[#allocation2 + $0xd8] sm:$0xff]
        %v351 = vld [vmem:[#allocation2 + $0xe0] sm:$0xff]
        %v352 = vld [vmem:[#allocation2 + $0xe8] sm:$0xff]
        %v353 = vld [vmem:[#allocation2 + $0xf0] sm:$0xff]
        %v354 = vld [vmem:[#allocation2 + $0xf8] sm:$0xff]
        %v355 = vld [vmem:[#allocation2 + $0x100] sm:$0xff]
        %v356 = vld [vmem:[#allocation2 + $0x108] sm:$0xff]
        %v357 = vld [vmem:[#allocation2 + $0x110] sm:$0xff]
        %v358 = vld [vmem:[#allocation2 + $0x118] sm:$0xff]
        %v359 = vld [vmem:[#allocation2 + $0x120] sm:$0xff]
        %v360 = vld [vmem:[#allocation2 + $0x128] sm:$0xff]
        %v361 = vld [vmem:[#allocation2 + $0x130] sm:$0xff]
        %v362 = vld [vmem:[#allocation2 + $0x138] sm:$0xff]
        %v363 = vld [vmem:[#allocation2 + $0x140] sm:$0xff]
        %v364 = vld [vmem:[#allocation2 + $0x148] sm:$0xff]
        %v365 = vld [vmem:[#allocation2 + $0x150] sm:$0xff]
        %v366 = vld [vmem:[#allocation2 + $0x158] sm:$0xff]
        %v367 = vld [vmem:[#allocation2 + $0x160] sm:$0xff]
        %v368 = vld [vmem:[#allocation2 + $0x168] sm:$0xff]
        %v369 = vld [vmem:[#allocation2 + $0x170] sm:$0xff]
        %v370 = vld [vmem:[#allocation2 + $0x178] sm:$0xff]
        %v371 = vld [vmem:[#allocation2 + $0x180] sm:$0xff]
        %v372 = vld [vmem:[#allocation2 + $0x188] sm:$0xff]
        %v373 = vld [vmem:[#allocation2 + $0x190] sm:$0xff]
        %v374 = vld [vmem:[#allocation2 + $0x198] sm:$0xff]
        %v375 = vld [vmem:[#allocation2 + $0x1a0] sm:$0xff]
        %v376 = vld [vmem:[#allocation2 + $0x1a8] sm:$0xff]
        %v377 = vld [vmem:[#allocation2 + $0x1b0] sm:$0xff]
        %v378 = vld [vmem:[#allocation2 + $0x1b8] sm:$0xff]
        %v379 = vld [vmem:[#allocation2 + $0x1c0] sm:$0xff]
        %v380 = vld [vmem:[#allocation2 + $0x1c8] sm:$0xff]
        %v381 = vld [vmem:[#allocation2 + $0x1d0] sm:$0xff]
        %v382 = vld [vmem:[#allocation2 + $0x1d8] sm:$0xff]
        %v383 = vld [vmem:[#allocation2 + $0x1e0] sm:$0xff]
        %v384 = vld [vmem:[#allocation2 + $0x1e8] sm:$0xff]
        %v385 = vld [vmem:[#allocation2 + $0x1f0] sm:$0xff]
        %v386 = vld [vmem:[#allocation2 + $0x1f8] sm:$0xff]
        %v387 = vld [vmem:[#allocation2 + $0x200] sm:$0xff]
        %v388 = vld [vmem:[#allocation2 + $0x208] sm:$0xff]
        %v389 = vld [vmem:[#allocation2 + $0x210] sm:$0xff]
        %v390 = vld [vmem:[#allocation2 + $0x218] sm:$0xff]
        %v391 = vld [vmem:[#allocation2 + $0x220] sm:$0xff]
        %v392 = vld [vmem:[#allocation2 + $0x228] sm:$0xff]
        %v393 = vld [vmem:[#allocation2 + $0x230] sm:$0xff]
        %v394 = vld [vmem:[#allocation2 + $0x238] sm:$0xff]
        %v395 = vld [vmem:[#allocation2 + $0x240] sm:$0xff]
        %v396 = vld [vmem:[#allocation2 + $0x248] sm:$0xff]
        %v397 = vld [vmem:[#allocation2 + $0x250] sm:$0xff]
        %v398 = vld [vmem:[#allocation2 + $0x258] sm:$0xff]
        %v399 = vld [vmem:[#allocation2 + $0x260] sm:$0xff]
        %v400 = vld [vmem:[#allocation2 + $0x268] sm:$0xff]
        %v401 = vld [vmem:[#allocation2 + $0x270] sm:$0xff]
        %v402 = vld [vmem:[#allocation2 + $0x278] sm:$0xff]
        %v403 = vld [vmem:[#allocation2 + $0x280] sm:$0xff]
        %v404 = vld [vmem:[#allocation2 + $0x288] sm:$0xff]
        %v405 = vld [vmem:[#allocation2 + $0x290] sm:$0xff]
        %v406 = vld [vmem:[#allocation2 + $0x298] sm:$0xff]
        %v407 = vld [vmem:[#allocation2 + $0x2a0] sm:$0xff]
        %v408 = vld [vmem:[#allocation2 + $0x2a8] sm:$0xff]
        %v409 = vld [vmem:[#allocation2 + $0x2b0] sm:$0xff]
        %v410 = vld [vmem:[#allocation2 + $0x2b8] sm:$0xff]
        %v411 = vld [vmem:[#allocation2 + $0x2c0] sm:$0xff]
        %v412 = vld [vmem:[#allocation2 + $0x2c8] sm:$0xff]
        %v413 = vld [vmem:[#allocation2 + $0x2d0] sm:$0xff]
        %v414 = vld [vmem:[#allocation2 + $0x2d8] sm:$0xff]
        %v415 = vld [vmem:[#allocation2 + $0x2e0] sm:$0xff]
        %v416 = vld [vmem:[#allocation2 + $0x2e8] sm:$0xff]
        %v417 = vld [vmem:[#allocation2 + $0x2f0] sm:$0xff]
        %v418 = vld [vmem:[#allocation2 + $0x2f8] sm:$0xff]
        %v419 = vld [vmem:[#allocation3] sm:$0xff]
        %v420 = vld [vmem:[#allocation3 + $0x8] sm:$0xff]
        %v421 = vld [vmem:[#allocation3 + $0x10] sm:$0xff]
        %v422 = vld [vmem:[#allocation3 + $0x18] sm:$0xff]
        %v423 = vld [vmem:[#allocation3 + $0x20] sm:$0xff]
        %v424 = vld [vmem:[#allocation3 + $0x28] sm:$0xff]
        %v425 = vld [vmem:[#allocation3 + $0x30] sm:$0xff]
        %v426 = vld [vmem:[#allocation3 + $0x38] sm:$0xff]
        %v427 = vld [vmem:[#allocation3 + $0x40] sm:$0xff]
        %v428 = vld [vmem:[#allocation3 + $0x48] sm:$0xff]
        %v429 = vld [vmem:[#allocation3 + $0x50] sm:$0xff]
        %v430 = vld [vmem:[#allocation3 + $0x58] sm:$0xff]
        %v431 = vld [vmem:[#allocation3 + $0x60] sm:$0xff]
        %v432 = vld [vmem:[#allocation3 + $0x68] sm:$0xff]
        %v433 = vld [vmem:[#allocation3 + $0x70] sm:$0xff]
        %v434 = vld [vmem:[#allocation3 + $0x78] sm:$0xff]
        %v435 = vld [vmem:[#allocation3 + $0x80] sm:$0xff]
        %v436 = vld [vmem:[#allocation3 + $0x88] sm:$0xff]
        %v437 = vld [vmem:[#allocation3 + $0x90] sm:$0xff]
        %v438 = vld [vmem:[#allocation3 + $0x98] sm:$0xff]
        %v439 = vld [vmem:[#allocation3 + $0xa0] sm:$0xff]
        %v440 = vld [vmem:[#allocation3 + $0xa8] sm:$0xff]
        %v441 = vld [vmem:[#allocation3 + $0xb0] sm:$0xff]
        %v442 = vld [vmem:[#allocation3 + $0xb8] sm:$0xff]
        %v443 = vld [vmem:[#allocation3 + $0xc0] sm:$0xff]
        %v444 = vld [vmem:[#allocation3 + $0xc8] sm:$0xff]
        %v445 = vld [vmem:[#allocation3 + $0xd0] sm:$0xff]
        %v446 = vld [vmem:[#allocation3 + $0xd8] sm:$0xff]
        %v447 = vld [vmem:[#allocation3 + $0xe0] sm:$0xff]
        %v448 = vld [vmem:[#allocation3 + $0xe8] sm:$0xff]
        %v449 = vld [vmem:[#allocation3 + $0xf0] sm:$0xff]
        %v450 = vld [vmem:[#allocation3 + $0xf8] sm:$0xff]
        %v451 = vld [vmem:[#allocation3 + $0x100] sm:$0xff]
        %v452 = vld [vmem:[#allocation3 + $0x108] sm:$0xff]
        %v453 = vld [vmem:[#allocation3 + $0x110] sm:$0xff]
        %v454 = vld [vmem:[#allocation3 + $0x118] sm:$0xff]
        %v455 = vld [vmem:[#allocation3 + $0x120] sm:$0xff]
        %v456 = vld [vmem:[#allocation3 + $0x128] sm:$0xff]
        %v457 = vld [vmem:[#allocation3 + $0x130] sm:$0xff]
        %v458 = vld [vmem:[#allocation3 + $0x138] sm:$0xff]
        %v459 = vld [vmem:[#allocation3 + $0x140] sm:$0xff]
        %v460 = vld [vmem:[#allocation3 + $0x148] sm:$0xff]
        %v461 = vld [vmem:[#allocation3 + $0x150] sm:$0xff]
        %v462 = vld [vmem:[#allocation3 + $0x158] sm:$0xff]
        %v463 = vld [vmem:[#allocation3 + $0x160] sm:$0xff]
        %v464 = vld [vmem:[#allocation3 + $0x168] sm:$0xff]
        %v465 = vld [vmem:[#allocation3 + $0x170] sm:$0xff]
        %v466 = vld [vmem:[#allocation3 + $0x178] sm:$0xff]
        %v467 = vld [vmem:[#allocation3 + $0x180] sm:$0xff]
        %v468 = vld [vmem:[#allocation3 + $0x188] sm:$0xff]
        %v469 = vld [vmem:[#allocation3 + $0x190] sm:$0xff]
        %v470 = vld [vmem:[#allocation3 + $0x198] sm:$0xff]
        %v471 = vld [vmem:[#allocation3 + $0x1a0] sm:$0xff]
        %v472 = vld [vmem:[#allocation3 + $0x1a8] sm:$0xff]
        %v473 = vld [vmem:[#allocation3 + $0x1b0] sm:$0xff]
        %v474 = vld [vmem:[#allocation3 + $0x1b8] sm:$0xff]
        %v475 = vld [vmem:[#allocation3 + $0x1c0] sm:$0xff]
        %v476 = vld [vmem:[#allocation3 + $0x1c8] sm:$0xff]
        %v477 = vld [vmem:[#allocation3 + $0x1d0] sm:$0xff]
        %v478 = vld [vmem:[#allocation3 + $0x1d8] sm:$0xff]
        %v479 = vld [vmem:[#allocation3 + $0x1e0] sm:$0xff]
        %v480 = vld [vmem:[#allocation3 + $0x1e8] sm:$0xff]
        %v481 = vld [vmem:[#allocation3 + $0x1f0] sm:$0xff]
        %v482 = vld [vmem:[#allocation3 + $0x1f8] sm:$0xff]
        %v483 = vpack.c.bf16 %v421, %v419
        %v484 = vpack.c.bf16 %v422, %v420
        %v485 = vpack.c.bf16 %v425, %v423
        %v486 = vpack.c.bf16 %v426, %v424
        %v487 = vpack.c.bf16 %v429, %v427
        %v488 = vpack.c.bf16 %v430, %v428
        %v489 = vpack.c.bf16 %v433, %v431
        %v490 = vpack.c.bf16 %v434, %v432
        %v491 = vpack.c.bf16 %v437, %v435
        %v492 = vpack.c.bf16 %v438, %v436
        %v493 = vpack.c.bf16 %v441, %v439
        %v494 = vpack.c.bf16 %v442, %v440
        %v495 = vpack.c.bf16 %v445, %v443
        %v496 = vpack.c.bf16 %v446, %v444
        %v497 = vpack.c.bf16 %v449, %v447
        %v498 = vpack.c.bf16 %v450, %v448
        %v499 = vpack.c.bf16 %v453, %v451
        %v500 = vpack.c.bf16 %v454, %v452
        %v501 = vpack.c.bf16 %v457, %v455
        %v502 = vpack.c.bf16 %v458, %v456
        %v503 = vpack.c.bf16 %v461, %v459
        %v504 = vpack.c.bf16 %v462, %v460
        %v505 = vpack.c.bf16 %v465, %v463
        %v506 = vpack.c.bf16 %v466, %v464
        %v507 = vpack.c.bf16 %v469, %v467
        %v508 = vpack.c.bf16 %v470, %v468
        %v509 = vpack.c.bf16 %v473, %v471
        %v510 = vpack.c.bf16 %v474, %v472
        %v511 = vpack.c.bf16 %v477, %v475
        %v512 = vpack.c.bf16 %v478, %v476
        %v513 = vpack.c.bf16 %v481, %v479
        %v514 = vpack.c.bf16 %v482, %v480
        %v515 = vld [vmem:[%s195] sm:$0xff]
        %v516 = vld [vmem:[%s195 + $0x8] sm:$0xf]
        %v517 = vld [vmem:[%s195 + $0xc] sm:$0xff]
        %v518 = vld [vmem:[%s195 + $0x14] sm:$0xf]
        %v519 = vld [vmem:[%s195 + $0x18] sm:$0xff]
        %v520 = vld [vmem:[%s195 + $0x20] sm:$0xf]
        %v521 = vld [vmem:[%s195 + $0x24] sm:$0xff]
        %v522 = vld [vmem:[%s195 + $0x2c] sm:$0xf]
        %v523 = vld [vmem:[%s195 + $0x30] sm:$0xff]
        %v524 = vld [vmem:[%s195 + $0x38] sm:$0xf]
        %v525 = vld [vmem:[%s195 + $0x3c] sm:$0xff]
        %v526 = vld [vmem:[%s195 + $0x44] sm:$0xf]
        %v527 = vld [vmem:[%s195 + $0x48] sm:$0xff]
        %v528 = vld [vmem:[%s195 + $0x50] sm:$0xf]
        %v529 = vld [vmem:[%s195 + $0x54] sm:$0xff]
        %v530 = vld [vmem:[%s195 + $0x5c] sm:$0xf]
        %v531 = vld [vmem:[%s195 + $0x60] sm:$0xff]
        %v532 = vld [vmem:[%s195 + $0x68] sm:$0xf]
        %v533 = vld [vmem:[%s195 + $0x6c] sm:$0xff]
        %v534 = vld [vmem:[%s195 + $0x74] sm:$0xf]
        %v535 = vld [vmem:[%s195 + $0x78] sm:$0xff]
        %v536 = vld [vmem:[%s195 + $0x80] sm:$0xf]
        %v537 = vld [vmem:[%s195 + $0x84] sm:$0xff]
        %v538 = vld [vmem:[%s195 + $0x8c] sm:$0xf]
        %v539 = vld [vmem:[%s195 + $0x90] sm:$0xff]
        %v540 = vld [vmem:[%s195 + $0x98] sm:$0xf]
        %v541 = vld [vmem:[%s195 + $0x9c] sm:$0xff]
        %v542 = vld [vmem:[%s195 + $0xa4] sm:$0xf]
        %v543 = vld [vmem:[%s195 + $0xa8] sm:$0xff]
        %v544 = vld [vmem:[%s195 + $0xb0] sm:$0xf]
        %v545 = vld [vmem:[%s195 + $0xb4] sm:$0xff]
        %v546 = vld [vmem:[%s195 + $0xbc] sm:$0xf]
        %v547 = vld [vmem:[%s195 + $0xc0] sm:$0xff]
        %v548 = vld [vmem:[%s195 + $0xc8] sm:$0xf]
        %v549 = vld [vmem:[%s195 + $0xcc] sm:$0xff]
        %v550 = vld [vmem:[%s195 + $0xd4] sm:$0xf]
        %v551 = vld [vmem:[%s195 + $0xd8] sm:$0xff]
        %v552 = vld [vmem:[%s195 + $0xe0] sm:$0xf]
        %v553 = vld [vmem:[%s195 + $0xe4] sm:$0xff]
        %v554 = vld [vmem:[%s195 + $0xec] sm:$0xf]
        %v555 = vld [vmem:[%s195 + $0xf0] sm:$0xff]
        %v556 = vld [vmem:[%s195 + $0xf8] sm:$0xf]
        %v557 = vld [vmem:[%s195 + $0xfc] sm:$0xff]
        %v558 = vld [vmem:[%s195 + $0x104] sm:$0xf]
        %v559 = vld [vmem:[%s195 + $0x108] sm:$0xff]
        %v560 = vld [vmem:[%s195 + $0x110] sm:$0xf]
        %v561 = vld [vmem:[%s195 + $0x114] sm:$0xff]
        %v562 = vld [vmem:[%s195 + $0x11c] sm:$0xf]
        %v563 = vld [vmem:[%s195 + $0x120] sm:$0xff]
        %v564 = vld [vmem:[%s195 + $0x128] sm:$0xf]
        %v565 = vld [vmem:[%s195 + $0x12c] sm:$0xff]
        %v566 = vld [vmem:[%s195 + $0x134] sm:$0xf]
        %v567 = vld [vmem:[%s195 + $0x138] sm:$0xff]
        %v568 = vld [vmem:[%s195 + $0x140] sm:$0xf]
        %v569 = vld [vmem:[%s195 + $0x144] sm:$0xff]
        %v570 = vld [vmem:[%s195 + $0x14c] sm:$0xf]
        %v571 = vld [vmem:[%s195 + $0x150] sm:$0xff]
        %v572 = vld [vmem:[%s195 + $0x158] sm:$0xf]
        %v573 = vld [vmem:[%s195 + $0x15c] sm:$0xff]
        %v574 = vld [vmem:[%s195 + $0x164] sm:$0xf]
        %v575 = vld [vmem:[%s195 + $0x168] sm:$0xff]
        %v576 = vld [vmem:[%s195 + $0x170] sm:$0xf]
        %v577 = vld [vmem:[%s195 + $0x174] sm:$0xff]
        %v578 = vld [vmem:[%s195 + $0x17c] sm:$0xf]
        %v643 = vunpack.c.l.b16 %v515
        %v644 = vunpack.c.h.b16 %v515
        %v645 = vunpack.c.l.b16 %v516
        %v646 = vunpack.c.l.b16 %v517
        %v647 = vunpack.c.h.b16 %v517
        %v648 = vunpack.c.l.b16 %v518
        %v649 = vunpack.c.l.b16 %v519
        %v650 = vunpack.c.h.b16 %v519
        %v651 = vunpack.c.l.b16 %v520
        %v652 = vunpack.c.l.b16 %v521
        %v653 = vunpack.c.h.b16 %v521
        %v654 = vunpack.c.l.b16 %v522
        %v655 = vunpack.c.l.b16 %v523
        %v656 = vunpack.c.h.b16 %v523
        %v657 = vunpack.c.l.b16 %v524
        %v658 = vunpack.c.l.b16 %v525
        %v659 = vunpack.c.h.b16 %v525
        %v660 = vunpack.c.l.b16 %v526
        %v661 = vunpack.c.l.b16 %v527
        %v662 = vunpack.c.h.b16 %v527
        %v663 = vunpack.c.l.b16 %v528
        %v664 = vunpack.c.l.b16 %v529
        %v665 = vunpack.c.h.b16 %v529
        %v666 = vunpack.c.l.b16 %v530
        %v667 = vunpack.c.l.b16 %v531
        %v668 = vunpack.c.h.b16 %v531
        %v669 = vunpack.c.l.b16 %v532
        %v670 = vunpack.c.l.b16 %v533
        %v671 = vunpack.c.h.b16 %v533
        %v672 = vunpack.c.l.b16 %v534
        %v673 = vunpack.c.l.b16 %v535
        %v674 = vunpack.c.h.b16 %v535
        %v675 = vunpack.c.l.b16 %v536
        %v676 = vunpack.c.l.b16 %v537
        %v677 = vunpack.c.h.b16 %v537
        %v678 = vunpack.c.l.b16 %v538
        %v679 = vunpack.c.l.b16 %v539
        %v680 = vunpack.c.h.b16 %v539
        %v681 = vunpack.c.l.b16 %v540
        %v682 = vunpack.c.l.b16 %v541
        %v683 = vunpack.c.h.b16 %v541
        %v684 = vunpack.c.l.b16 %v542
        %v685 = vunpack.c.l.b16 %v543
        %v686 = vunpack.c.h.b16 %v543
        %v687 = vunpack.c.l.b16 %v544
        %v688 = vunpack.c.l.b16 %v545
        %v689 = vunpack.c.h.b16 %v545
        %v690 = vunpack.c.l.b16 %v546
        %v691 = vunpack.c.l.b16 %v547
        %v692 = vunpack.c.h.b16 %v547
        %v693 = vunpack.c.l.b16 %v548
        %v694 = vunpack.c.l.b16 %v549
        %v695 = vunpack.c.h.b16 %v549
        %v696 = vunpack.c.l.b16 %v550
        %v697 = vunpack.c.l.b16 %v551
        %v698 = vunpack.c.h.b16 %v551
        %v699 = vunpack.c.l.b16 %v552
        %v700 = vunpack.c.l.b16 %v553
        %v701 = vunpack.c.h.b16 %v553
        %v702 = vunpack.c.l.b16 %v554
        %v703 = vunpack.c.l.b16 %v555
        %v704 = vunpack.c.h.b16 %v555
        %v705 = vunpack.c.l.b16 %v556
        %v706 = vunpack.c.l.b16 %v557
        %v707 = vunpack.c.h.b16 %v557
        %v708 = vunpack.c.l.b16 %v558
        %v709 = vunpack.c.l.b16 %v559
        %v710 = vunpack.c.h.b16 %v559
        %v711 = vunpack.c.l.b16 %v560
        %v712 = vunpack.c.l.b16 %v561
        %v713 = vunpack.c.h.b16 %v561
        %v714 = vunpack.c.l.b16 %v562
        %v715 = vunpack.c.l.b16 %v563
        %v716 = vunpack.c.h.b16 %v563
        %v717 = vunpack.c.l.b16 %v564
        %v718 = vunpack.c.l.b16 %v565
        %v719 = vunpack.c.h.b16 %v565
        %v720 = vunpack.c.l.b16 %v566
        %v721 = vunpack.c.l.b16 %v567
        %v722 = vunpack.c.h.b16 %v567
        %v723 = vunpack.c.l.b16 %v568
        %v724 = vunpack.c.l.b16 %v569
        %v725 = vunpack.c.h.b16 %v569
        %v726 = vunpack.c.l.b16 %v570
        %v727 = vunpack.c.l.b16 %v571
        %v728 = vunpack.c.h.b16 %v571
        %v729 = vunpack.c.l.b16 %v572
        %v730 = vunpack.c.l.b16 %v573
        %v731 = vunpack.c.h.b16 %v573
        %v732 = vunpack.c.l.b16 %v574
        %v733 = vunpack.c.l.b16 %v575
        %v734 = vunpack.c.h.b16 %v575
        %v735 = vunpack.c.l.b16 %v576
        %v736 = vunpack.c.l.b16 %v577
        %v737 = vunpack.c.h.b16 %v577
        %v738 = vunpack.c.l.b16 %v578
        %v739 = vpack.c.b16 %v646, %v643
        %v740 = vpack.c.b16 %v647, %v644
        %v741 = vpack.c.b16 %v648, %v645
        %v742 = vpack.c.b16 %v652, %v649
        %v743 = vpack.c.b16 %v653, %v650
        %v744 = vpack.c.b16 %v654, %v651
        %v745 = vpack.c.b16 %v658, %v655
        %v746 = vpack.c.b16 %v659, %v656
        %v747 = vpack.c.b16 %v660, %v657
        %v748 = vpack.c.b16 %v664, %v661
        %v749 = vpack.c.b16 %v665, %v662
        %v750 = vpack.c.b16 %v666, %v663
        %v751 = vpack.c.b16 %v670, %v667
        %v752 = vpack.c.b16 %v671, %v668
        %v753 = vpack.c.b16 %v672, %v669
        %v754 = vpack.c.b16 %v676, %v673
        %v755 = vpack.c.b16 %v677, %v674
        %v756 = vpack.c.b16 %v678, %v675
        %v757 = vpack.c.b16 %v682, %v679
        %v758 = vpack.c.b16 %v683, %v680
        %v759 = vpack.c.b16 %v684, %v681
        %v760 = vpack.c.b16 %v688, %v685
        %v761 = vpack.c.b16 %v689, %v686
        %v762 = vpack.c.b16 %v690, %v687
        %v763 = vpack.c.b16 %v694, %v691
        %v764 = vpack.c.b16 %v695, %v692
        %v765 = vpack.c.b16 %v696, %v693
        %v766 = vpack.c.b16 %v700, %v697
        %v767 = vpack.c.b16 %v701, %v698
        %v768 = vpack.c.b16 %v702, %v699
        %v769 = vpack.c.b16 %v706, %v703
        %v770 = vpack.c.b16 %v707, %v704
        %v771 = vpack.c.b16 %v708, %v705
        %v772 = vpack.c.b16 %v712, %v709
        %v773 = vpack.c.b16 %v713, %v710
        %v774 = vpack.c.b16 %v714, %v711
        %v775 = vpack.c.b16 %v718, %v715
        %v776 = vpack.c.b16 %v719, %v716
        %v777 = vpack.c.b16 %v720, %v717
        %v778 = vpack.c.b16 %v724, %v721
        %v779 = vpack.c.b16 %v725, %v722
        %v780 = vpack.c.b16 %v726, %v723
        %v781 = vpack.c.b16 %v730, %v727
        %v782 = vpack.c.b16 %v731, %v728
        %v783 = vpack.c.b16 %v732, %v729
        %v784 = vpack.c.b16 %v736, %v733
        %v785 = vpack.c.b16 %v737, %v734
        %v786 = vpack.c.b16 %v738, %v735
        %835 = vmatprep.subr.bf16.mxu0 %v740
        %836 = vmatpush1.bf16.msra.mxu0 %v739
        %837 = vmatprep.subr.bf16.mxu0 %v743
        %838 = vmatpush1.bf16.msra.mxu0 %v742
        %839 = vmatprep.subr.bf16.mxu0 %v746
        %840 = vmatpush1.bf16.msra.mxu0 %v745
        %841 = vmatprep.subr.bf16.mxu0 %v749
        %842 = vmatpush1.bf16.msra.mxu0 %v748
        %843 = vmatprep.subr.bf16.mxu0 %v752
        %844 = vmatpush1.bf16.msra.mxu0 %v751
        %845 = vmatprep.subr.bf16.mxu0 %v755
        %846 = vmatpush1.bf16.msra.mxu0 %v754
        %847 = vmatprep.subr.bf16.mxu0 %v758
        %848 = vmatpush1.bf16.msra.mxu0 %v757
        %849 = vmatprep.subr.bf16.mxu0 %v761
        %850 = vmatpush1.bf16.msra.mxu0 %v760
        %851 = vmatprep.subr.bf16.mxu0 %v764
        %852 = vmatpush1.bf16.msra.mxu0 %v763
        %853 = vmatprep.subr.bf16.mxu0 %v767
        %854 = vmatpush1.bf16.msra.mxu0 %v766
        %855 = vmatprep.subr.bf16.mxu0 %v770
        %856 = vmatpush1.bf16.msra.mxu0 %v769
        %857 = vmatprep.subr.bf16.mxu0 %v773
        %858 = vmatpush1.bf16.msra.mxu0 %v772
        %859 = vmatprep.subr.bf16.mxu0 %v776
        %860 = vmatpush1.bf16.msra.mxu0 %v775
        %861 = vmatprep.subr.bf16.mxu0 %v779
        %862 = vmatpush1.bf16.msra.mxu0 %v778
        %863 = vmatprep.subr.bf16.mxu0 %v782
        %864 = vmatpush1.bf16.msra.mxu0 %v781
        %865 = vmatprep.subr.bf16.mxu0 %v785
        %866 = vmatpush1.bf16.msra.mxu0 %v784
        %867 = vmatprep.mubr.bf16.mxu0 %v484
        %868 = vmatmul.mubr.bf16.gmra.mrb[0].mxu0 %v483
        %v869 = vpop.f32.mrb[0].mxu0
        %v870 = vadd.f32 0.0, %v869
        %v871 = vpop.f32.mrb[0].mxu0
        %v872 = vadd.f32 0.0, %v871
        %v873 = vpop.f32.mrb[0].mxu0
        %v874 = vadd.f32 0.0, %v873
        %v875 = vpop.f32.mrb[0].mxu0
        %v876 = vadd.f32 0.0, %v875
        %877 = vmatprep.mubr.bf16.mxu0 %v486
        %878 = vmatmul.mubr.bf16.gmra.mrb[0].mxu0 %v485
        %v879 = vpop.f32.mrb[0].mxu0
        %v880 = vadd.f32 0.0, %v879
        %v881 = vpop.f32.mrb[0].mxu0
        %v882 = vadd.f32 0.0, %v881
        %v883 = vpop.f32.mrb[0].mxu0
        %v884 = vadd.f32 0.0, %v883
        %v885 = vpop.f32.mrb[0].mxu0
        %v886 = vadd.f32 0.0, %v885
        %887 = vmatprep.mubr.bf16.mxu0 %v488
        %888 = vmatmul.mubr.bf16.gmra.mrb[0].mxu0 %v487
        %v889 = vpop.f32.mrb[0].mxu0
        %v890 = vadd.f32 0.0, %v889
        %v891 = vpop.f32.mrb[0].mxu0
        %v892 = vadd.f32 0.0, %v891
        %v893 = vpop.f32.mrb[0].mxu0
        %v894 = vadd.f32 0.0, %v893
        %v895 = vpop.f32.mrb[0].mxu0
        %v896 = vadd.f32 0.0, %v895
        %897 = vmatprep.mubr.bf16.mxu0 %v490
        %898 = vmatmul.mubr.bf16.gmra.mrb[0].mxu0 %v489
        %v899 = vpop.f32.mrb[0].mxu0
        %v900 = vadd.f32 0.0, %v899
        %v901 = vpop.f32.mrb[0].mxu0
        %v902 = vadd.f32 0.0, %v901
        %v903 = vpop.f32.mrb[0].mxu0
        %v904 = vadd.f32 0.0, %v903
        %v905 = vpop.f32.mrb[0].mxu0
        %v906 = vadd.f32 0.0, %v905
        %907 = vmatprep.mubr.bf16.mxu0 %v492
        %908 = vmatmul.mubr.bf16.gmra.mrb[0].mxu0 %v491
        %v909 = vpop.f32.mrb[0].mxu0
        %v910 = vadd.f32 0.0, %v909
        %v911 = vpop.f32.mrb[0].mxu0
        %v912 = vadd.f32 0.0, %v911
        %v913 = vpop.f32.mrb[0].mxu0
        %v914 = vadd.f32 0.0, %v913
        %v915 = vpop.f32.mrb[0].mxu0
        %v916 = vadd.f32 0.0, %v915
        %917 = vmatprep.mubr.bf16.mxu0 %v494
        %918 = vmatmul.mubr.bf16.gmra.mrb[0].mxu0 %v493
        %v919 = vpop.f32.mrb[0].mxu0
        %v920 = vadd.f32 0.0, %v919
        %v921 = vpop.f32.mrb[0].mxu0
        %v922 = vadd.f32 0.0, %v921
        %v923 = vpop.f32.mrb[0].mxu0
        %v924 = vadd.f32 0.0, %v923
        %v925 = vpop.f32.mrb[0].mxu0
        %v926 = vadd.f32 0.0, %v925
        %927 = vmatprep.mubr.bf16.mxu0 %v496
        %928 = vmatmul.mubr.bf16.gmra.mrb[0].mxu0 %v495
        %v929 = vpop.f32.mrb[0].mxu0
        %v930 = vadd.f32 0.0, %v929
        %v931 = vpop.f32.mrb[0].mxu0
        %v932 = vadd.f32 0.0, %v931
        %v933 = vpop.f32.mrb[0].mxu0
        %v934 = vadd.f32 0.0, %v933
        %v935 = vpop.f32.mrb[0].mxu0
        %v936 = vadd.f32 0.0, %v935
        %937 = vmatprep.mubr.bf16.mxu0 %v498
        %938 = vmatmul.mubr.bf16.gmra.mrb[0].mxu0 %v497
        %v939 = vpop.f32.mrb[0].mxu0
        %v940 = vadd.f32 0.0, %v939
        %v941 = vpop.f32.mrb[0].mxu0
        %v942 = vadd.f32 0.0, %v941
        %v943 = vpop.f32.mrb[0].mxu0
        %v944 = vadd.f32 0.0, %v943
        %v945 = vpop.f32.mrb[0].mxu0
        %v946 = vadd.f32 0.0, %v945
        %947 = vmatprep.mubr.bf16.mxu0 %v500
        %948 = vmatmul.mubr.bf16.gmra.mrb[0].mxu0 %v499
        %v949 = vpop.f32.mrb[0].mxu0
        %v950 = vadd.f32 0.0, %v949
        %v951 = vpop.f32.mrb[0].mxu0
        %v952 = vadd.f32 0.0, %v951
        %v953 = vpop.f32.mrb[0].mxu0
        %v954 = vadd.f32 0.0, %v953
        %v955 = vpop.f32.mrb[0].mxu0
        %v956 = vadd.f32 0.0, %v955
        %957 = vmatprep.mubr.bf16.mxu0 %v502
        %958 = vmatmul.mubr.bf16.gmra.mrb[0].mxu0 %v501
        %v959 = vpop.f32.mrb[0].mxu0
        %v960 = vadd.f32 0.0, %v959
        %v961 = vpop.f32.mrb[0].mxu0
        %v962 = vadd.f32 0.0, %v961
        %v963 = vpop.f32.mrb[0].mxu0
        %v964 = vadd.f32 0.0, %v963
        %v965 = vpop.f32.mrb[0].mxu0
        %v966 = vadd.f32 0.0, %v965
        %967 = vmatprep.mubr.bf16.mxu0 %v504
        %968 = vmatmul.mubr.bf16.gmra.mrb[0].mxu0 %v503
        %v969 = vpop.f32.mrb[0].mxu0
        %v970 = vadd.f32 0.0, %v969
        %v971 = vpop.f32.mrb[0].mxu0
        %v972 = vadd.f32 0.0, %v971
        %v973 = vpop.f32.mrb[0].mxu0
        %v974 = vadd.f32 0.0, %v973
        %v975 = vpop.f32.mrb[0].mxu0
        %v976 = vadd.f32 0.0, %v975
        %977 = vmatprep.mubr.bf16.mxu0 %v506
        %978 = vmatmul.mubr.bf16.gmra.mrb[0].mxu0 %v505
        %v979 = vpop.f32.mrb[0].mxu0
        %v980 = vadd.f32 0.0, %v979
        %v981 = vpop.f32.mrb[0].mxu0
        %v982 = vadd.f32 0.0, %v981
        %v983 = vpop.f32.mrb[0].mxu0
        %v984 = vadd.f32 0.0, %v983
        %v985 = vpop.f32.mrb[0].mxu0
        %v986 = vadd.f32 0.0, %v985
        %987 = vmatprep.mubr.bf16.mxu0 %v508
        %988 = vmatmul.mubr.bf16.gmra.mrb[0].mxu0 %v507
        %v989 = vpop.f32.mrb[0].mxu0
        %v990 = vadd.f32 0.0, %v989
        %v991 = vpop.f32.mrb[0].mxu0
        %v992 = vadd.f32 0.0, %v991
        %v993 = vpop.f32.mrb[0].mxu0
        %v994 = vadd.f32 0.0, %v993
        %v995 = vpop.f32.mrb[0].mxu0
        %v996 = vadd.f32 0.0, %v995
        %997 = vmatprep.mubr.bf16.mxu0 %v510
        %998 = vmatmul.mubr.bf16.gmra.mrb[0].mxu0 %v509
        %v999 = vpop.f32.mrb[0].mxu0
        %v1000 = vadd.f32 0.0, %v999
        %v1001 = vpop.f32.mrb[0].mxu0
        %v1002 = vadd.f32 0.0, %v1001
        %v1003 = vpop.f32.mrb[0].mxu0
        %v1004 = vadd.f32 0.0, %v1003
        %v1005 = vpop.f32.mrb[0].mxu0
        %v1006 = vadd.f32 0.0, %v1005
        %1007 = vmatprep.mubr.bf16.mxu0 %v512
        %1008 = vmatmul.mubr.bf16.gmra.mrb[0].mxu0 %v511
        %v1009 = vpop.f32.mrb[0].mxu0
        %v1010 = vadd.f32 0.0, %v1009
        %v1011 = vpop.f32.mrb[0].mxu0
        %v1012 = vadd.f32 0.0, %v1011
        %v1013 = vpop.f32.mrb[0].mxu0
        %v1014 = vadd.f32 0.0, %v1013
        %v1015 = vpop.f32.mrb[0].mxu0
        %v1016 = vadd.f32 0.0, %v1015
        %1017 = vmatprep.mubr.bf16.mxu0 %v514
        %1018 = vmatmul.mubr.bf16.gmra.mrb[0].mxu0 %v513
        %v1019 = vpop.f32.mrb[0].mxu0
        %v1020 = vadd.f32 0.0, %v1019
        %v1021 = vpop.f32.mrb[0].mxu0
        %v1022 = vadd.f32 0.0, %v1021
        %v1023 = vpop.f32.mrb[0].mxu0
        %v1024 = vadd.f32 0.0, %v1023
        %v1025 = vpop.f32.mrb[0].mxu0
        %v1026 = vadd.f32 0.0, %v1025
        %1027 = vdwg.mxu0
        %1028 = vmatprep.subr.bf16.mxu0 0
        %1029 = vmatpush1.bf16.msra.mxu0 %v741
        %1030 = vmatprep.subr.bf16.mxu0 0
        %1031 = vmatpush1.bf16.msra.mxu0 %v744
        %1032 = vmatprep.subr.bf16.mxu0 0
        %1033 = vmatpush1.bf16.msra.mxu0 %v747
        %1034 = vmatprep.subr.bf16.mxu0 0
        %1035 = vmatpush1.bf16.msra.mxu0 %v750
        %1036 = vmatprep.subr.bf16.mxu0 0
        %1037 = vmatpush1.bf16.msra.mxu0 %v753
        %1038 = vmatprep.subr.bf16.mxu0 0
        %1039 = vmatpush1.bf16.msra.mxu0 %v756
        %1040 = vmatprep.subr.bf16.mxu0 0
        %1041 = vmatpush1.bf16.msra.mxu0 %v759
        %1042 = vmatprep.subr.bf16.mxu0 0
        %1043 = vmatpush1.bf16.msra.mxu0 %v762
        %1044 = vmatprep.subr.bf16.mxu0 0
        %1045 = vmatpush1.bf16.msra.mxu0 %v765
        %1046 = vmatprep.subr.bf16.mxu0 0
        %1047 = vmatpush1.bf16.msra.mxu0 %v768
        %1048 = vmatprep.subr.bf16.mxu0 0
        %1049 = vmatpush1.bf16.msra.mxu0 %v771
        %1050 = vmatprep.subr.bf16.mxu0 0
        %1051 = vmatpush1.bf16.msra.mxu0 %v774
        %1052 = vmatprep.subr.bf16.mxu0 0
        %1053 = vmatpush1.bf16.msra.mxu0 %v777
        %1054 = vmatprep.subr.bf16.mxu0 0
        %1055 = vmatpush1.bf16.msra.mxu0 %v780
        %1056 = vmatprep.subr.bf16.mxu0 0
        %1057 = vmatpush1.bf16.msra.mxu0 %v783
        %1058 = vmatprep.subr.bf16.mxu0 0
        %1059 = vmatpush1.bf16.msra.mxu0 %v786
        %1060 = vmatprep.mubr.bf16.mxu0 %v484
        %1061 = vmatmul.mubr.bf16.gmra.mrb[0].mxu0 %v483
        %v1062 = vpop.f32.mrb[0].mxu0
        %v1063 = vadd.f32 0.0, %v1062
        %v1064 = vpop.f32.mrb[0].mxu0
        %v1065 = vpop.f32.mrb[0].mxu0
        %v1066 = vadd.f32 0.0, %v1065
        %v1067 = vpop.f32.mrb[0].mxu0
        %1068 = vmatprep.mubr.bf16.mxu0 %v486
        %1069 = vmatmul.mubr.bf16.gmra.mrb[0].mxu0 %v485
        %v1070 = vpop.f32.mrb[0].mxu0
        %v1071 = vadd.f32 0.0, %v1070
        %v1072 = vpop.f32.mrb[0].mxu0
        %v1073 = vpop.f32.mrb[0].mxu0
        %v1074 = vadd.f32 0.0, %v1073
        %v1075 = vpop.f32.mrb[0].mxu0
        %1076 = vmatprep.mubr.bf16.mxu0 %v488
        %1077 = vmatmul.mubr.bf16.gmra.mrb[0].mxu0 %v487
        %v1078 = vpop.f32.mrb[0].mxu0
        %v1079 = vadd.f32 0.0, %v1078
        %v1080 = vpop.f32.mrb[0].mxu0
        %v1081 = vpop.f32.mrb[0].mxu0
        %v1082 = vadd.f32 0.0, %v1081
        %v1083 = vpop.f32.mrb[0].mxu0
        %1084 = vmatprep.mubr.bf16.mxu0 %v490
        %1085 = vmatmul.mubr.bf16.gmra.mrb[0].mxu0 %v489
        %v1086 = vpop.f32.mrb[0].mxu0
        %v1087 = vadd.f32 0.0, %v1086
        %v1088 = vpop.f32.mrb[0].mxu0
        %v1089 = vpop.f32.mrb[0].mxu0
        %v1090 = vadd.f32 0.0, %v1089
        %v1091 = vpop.f32.mrb[0].mxu0
        %1092 = vmatprep.mubr.bf16.mxu0 %v492
        %1093 = vmatmul.mubr.bf16.gmra.mrb[0].mxu0 %v491
        %v1094 = vpop.f32.mrb[0].mxu0
        %v1095 = vadd.f32 0.0, %v1094
        %v1096 = vpop.f32.mrb[0].mxu0
        %v1097 = vpop.f32.mrb[0].mxu0
        %v1098 = vadd.f32 0.0, %v1097
        %v1099 = vpop.f32.mrb[0].mxu0
        %1100 = vmatprep.mubr.bf16.mxu0 %v494
        %1101 = vmatmul.mubr.bf16.gmra.mrb[0].mxu0 %v493
        %v1102 = vpop.f32.mrb[0].mxu0
        %v1103 = vadd.f32 0.0, %v1102
        %v1104 = vpop.f32.mrb[0].mxu0
        %v1105 = vpop.f32.mrb[0].mxu0
        %v1106 = vadd.f32 0.0, %v1105
        %v1107 = vpop.f32.mrb[0].mxu0
        %1108 = vmatprep.mubr.bf16.mxu0 %v496
        %1109 = vmatmul.mubr.bf16.gmra.mrb[0].mxu0 %v495
        %v1110 = vpop.f32.mrb[0].mxu0
        %v1111 = vadd.f32 0.0, %v1110
        %v1112 = vpop.f32.mrb[0].mxu0
        %v1113 = vpop.f32.mrb[0].mxu0
        %v1114 = vadd.f32 0.0, %v1113
        %v1115 = vpop.f32.mrb[0].mxu0
        %1116 = vmatprep.mubr.bf16.mxu0 %v498
        %1117 = vmatmul.mubr.bf16.gmra.mrb[0].mxu0 %v497
        %v1118 = vpop.f32.mrb[0].mxu0
        %v1119 = vadd.f32 0.0, %v1118
        %v1120 = vpop.f32.mrb[0].mxu0
        %v1121 = vpop.f32.mrb[0].mxu0
        %v1122 = vadd.f32 0.0, %v1121
        %v1123 = vpop.f32.mrb[0].mxu0
        %1124 = vmatprep.mubr.bf16.mxu0 %v500
        %1125 = vmatmul.mubr.bf16.gmra.mrb[0].mxu0 %v499
        %v1126 = vpop.f32.mrb[0].mxu0
        %v1127 = vadd.f32 0.0, %v1126
        %v1128 = vpop.f32.mrb[0].mxu0
        %v1129 = vpop.f32.mrb[0].mxu0
        %v1130 = vadd.f32 0.0, %v1129
        %v1131 = vpop.f32.mrb[0].mxu0
        %1132 = vmatprep.mubr.bf16.mxu0 %v502
        %1133 = vmatmul.mubr.bf16.gmra.mrb[0].mxu0 %v501
        %v1134 = vpop.f32.mrb[0].mxu0
        %v1135 = vadd.f32 0.0, %v1134
        %v1136 = vpop.f32.mrb[0].mxu0
        %v1137 = vpop.f32.mrb[0].mxu0
        %v1138 = vadd.f32 0.0, %v1137
        %v1139 = vpop.f32.mrb[0].mxu0
        %1140 = vmatprep.mubr.bf16.mxu0 %v504
        %1141 = vmatmul.mubr.bf16.gmra.mrb[0].mxu0 %v503
        %v1142 = vpop.f32.mrb[0].mxu0
        %v1143 = vadd.f32 0.0, %v1142
        %v1144 = vpop.f32.mrb[0].mxu0
        %v1145 = vpop.f32.mrb[0].mxu0
        %v1146 = vadd.f32 0.0, %v1145
        %v1147 = vpop.f32.mrb[0].mxu0
        %1148 = vmatprep.mubr.bf16.mxu0 %v506
        %1149 = vmatmul.mubr.bf16.gmra.mrb[0].mxu0 %v505
        %v1150 = vpop.f32.mrb[0].mxu0
        %v1151 = vadd.f32 0.0, %v1150
        %v1152 = vpop.f32.mrb[0].mxu0
        %v1153 = vpop.f32.mrb[0].mxu0
        %v1154 = vadd.f32 0.0, %v1153
        %v1155 = vpop.f32.mrb[0].mxu0
        %1156 = vmatprep.mubr.bf16.mxu0 %v508
        %1157 = vmatmul.mubr.bf16.gmra.mrb[0].mxu0 %v507
        %v1158 = vpop.f32.mrb[0].mxu0
        %v1159 = vadd.f32 0.0, %v1158
        %v1160 = vpop.f32.mrb[0].mxu0
        %v1161 = vpop.f32.mrb[0].mxu0
        %v1162 = vadd.f32 0.0, %v1161
        %v1163 = vpop.f32.mrb[0].mxu0
        %1164 = vmatprep.mubr.bf16.mxu0 %v510
        %1165 = vmatmul.mubr.bf16.gmra.mrb[0].mxu0 %v509
        %v1166 = vpop.f32.mrb[0].mxu0
        %v1167 = vadd.f32 0.0, %v1166
        %v1168 = vpop.f32.mrb[0].mxu0
        %v1169 = vpop.f32.mrb[0].mxu0
        %v1170 = vadd.f32 0.0, %v1169
        %v1171 = vpop.f32.mrb[0].mxu0
        %1172 = vmatprep.mubr.bf16.mxu0 %v512
        %1173 = vmatmul.mubr.bf16.gmra.mrb[0].mxu0 %v511
        %v1174 = vpop.f32.mrb[0].mxu0
        %v1175 = vadd.f32 0.0, %v1174
        %v1176 = vpop.f32.mrb[0].mxu0
        %v1177 = vpop.f32.mrb[0].mxu0
        %v1178 = vadd.f32 0.0, %v1177
        %v1179 = vpop.f32.mrb[0].mxu0
        %1180 = vmatprep.mubr.bf16.mxu0 %v514
        %1181 = vmatmul.mubr.bf16.gmra.mrb[0].mxu0 %v513
        %v1182 = vpop.f32.mrb[0].mxu0
        %v1183 = vadd.f32 0.0, %v1182
        %v1184 = vpop.f32.mrb[0].mxu0
        %v1185 = vpop.f32.mrb[0].mxu0
        %v1186 = vadd.f32 0.0, %v1185
        %v1187 = vpop.f32.mrb[0].mxu0
        %1188 = vdwg.mxu0
        %v1189 = vadd.f32 %v323, %v870
        %v1190 = vadd.f32 %v324, %v872
        %v1191 = vadd.f32 %v325, %v1063
        %v1192 = vadd.f32 %v326, %v874
        %v1193 = vadd.f32 %v327, %v876
        %v1194 = vadd.f32 %v328, %v1066
        %v1195 = vadd.f32 %v329, %v880
        %v1196 = vadd.f32 %v330, %v882
        %v1197 = vadd.f32 %v331, %v1071
        %v1198 = vadd.f32 %v332, %v884
        %v1199 = vadd.f32 %v333, %v886
        %v1200 = vadd.f32 %v334, %v1074
        %v1201 = vadd.f32 %v335, %v890
        %v1202 = vadd.f32 %v336, %v892
        %v1203 = vadd.f32 %v337, %v1079
        %v1204 = vadd.f32 %v338, %v894
        %v1205 = vadd.f32 %v339, %v896
        %v1206 = vadd.f32 %v340, %v1082
        %v1207 = vadd.f32 %v341, %v900
        %v1208 = vadd.f32 %v342, %v902
        %v1209 = vadd.f32 %v343, %v1087
        %v1210 = vadd.f32 %v344, %v904
        %v1211 = vadd.f32 %v345, %v906
        %v1212 = vadd.f32 %v346, %v1090
        %v1213 = vadd.f32 %v347, %v910
        %v1214 = vadd.f32 %v348, %v912
        %v1215 = vadd.f32 %v349, %v1095
        %v1216 = vadd.f32 %v350, %v914
        %v1217 = vadd.f32 %v351, %v916
        %v1218 = vadd.f32 %v352, %v1098
        %v1219 = vadd.f32 %v353, %v920
        %v1220 = vadd.f32 %v354, %v922
        %v1221 = vadd.f32 %v355, %v1103
        %v1222 = vadd.f32 %v356, %v924
        %v1223 = vadd.f32 %v357, %v926
        %v1224 = vadd.f32 %v358, %v1106
        %v1225 = vadd.f32 %v359, %v930
        %v1226 = vadd.f32 %v360, %v932
        %v1227 = vadd.f32 %v361, %v1111
        %v1228 = vadd.f32 %v362, %v934
        %v1229 = vadd.f32 %v363, %v936
        %v1230 = vadd.f32 %v364, %v1114
        %v1231 = vadd.f32 %v365, %v940
        %v1232 = vadd.f32 %v366, %v942
        %v1233 = vadd.f32 %v367, %v1119
        %v1234 = vadd.f32 %v368, %v944
        %v1235 = vadd.f32 %v369, %v946
        %v1236 = vadd.f32 %v370, %v1122
        %v1237 = vadd.f32 %v371, %v950
        %v1238 = vadd.f32 %v372, %v952
        %v1239 = vadd.f32 %v373, %v1127
        %v1240 = vadd.f32 %v374, %v954
        %v1241 = vadd.f32 %v375, %v956
        %v1242 = vadd.f32 %v376, %v1130
        %v1243 = vadd.f32 %v377, %v960
        %v1244 = vadd.f32 %v378, %v962
        %v1245 = vadd.f32 %v379, %v1135
        %v1246 = vadd.f32 %v380, %v964
        %v1247 = vadd.f32 %v381, %v966
        %v1248 = vadd.f32 %v382, %v1138
        %v1249 = vadd.f32 %v383, %v970
        %v1250 = vadd.f32 %v384, %v972
        %v1251 = vadd.f32 %v385, %v1143
        %v1252 = vadd.f32 %v386, %v974
        %v1253 = vadd.f32 %v387, %v976
        %v1254 = vadd.f32 %v388, %v1146
        %v1255 = vadd.f32 %v389, %v980
        %v1256 = vadd.f32 %v390, %v982
        %v1257 = vadd.f32 %v391, %v1151
        %v1258 = vadd.f32 %v392, %v984
        %v1259 = vadd.f32 %v393, %v986
        %v1260 = vadd.f32 %v394, %v1154
        %v1261 = vadd.f32 %v395, %v990
        %v1262 = vadd.f32 %v396, %v992
        %v1263 = vadd.f32 %v397, %v1159
        %v1264 = vadd.f32 %v398, %v994
        %v1265 = vadd.f32 %v399, %v996
        %v1266 = vadd.f32 %v400, %v1162
        %v1267 = vadd.f32 %v401, %v1000
        %v1268 = vadd.f32 %v402, %v1002
        %v1269 = vadd.f32 %v403, %v1167
        %v1270 = vadd.f32 %v404, %v1004
        %v1271 = vadd.f32 %v405, %v1006
        %v1272 = vadd.f32 %v406, %v1170
        %v1273 = vadd.f32 %v407, %v1010
        %v1274 = vadd.f32 %v408, %v1012
        %v1275 = vadd.f32 %v409, %v1175
        %v1276 = vadd.f32 %v410, %v1014
        %v1277 = vadd.f32 %v411, %v1016
        %v1278 = vadd.f32 %v412, %v1178
        %v1279 = vadd.f32 %v413, %v1020
        %v1280 = vadd.f32 %v414, %v1022
        %v1281 = vadd.f32 %v415, %v1183
        %v1282 = vadd.f32 %v416, %v1024
        %v1283 = vadd.f32 %v417, %v1026
        %v1284 = vadd.f32 %v418, %v1186
        %1285 = vst [vmem:[#allocation2] sm:$0xff] %v1189
        %1286 = vst [vmem:[#allocation2 + $0x8] sm:$0xff] %v1190
        %1287 = vst [vmem:[#allocation2 + $0x10] sm:$0xff] %v1191
        %1288 = vst [vmem:[#allocation2 + $0x18] sm:$0xff] %v1192
        %1289 = vst [vmem:[#allocation2 + $0x20] sm:$0xff] %v1193
        %1290 = vst [vmem:[#allocation2 + $0x28] sm:$0xff] %v1194
        %1291 = vst [vmem:[#allocation2 + $0x30] sm:$0xff] %v1195
        %1292 = vst [vmem:[#allocation2 + $0x38] sm:$0xff] %v1196
        %1293 = vst [vmem:[#allocation2 + $0x40] sm:$0xff] %v1197
        %1294 = vst [vmem:[#allocation2 + $0x48] sm:$0xff] %v1198
        %1295 = vst [vmem:[#allocation2 + $0x50] sm:$0xff] %v1199
        %1296 = vst [vmem:[#allocation2 + $0x58] sm:$0xff] %v1200
        %1297 = vst [vmem:[#allocation2 + $0x60] sm:$0xff] %v1201
        %1298 = vst [vmem:[#allocation2 + $0x68] sm:$0xff] %v1202
        %1299 = vst [vmem:[#allocation2 + $0x70] sm:$0xff] %v1203
        %1300 = vst [vmem:[#allocation2 + $0x78] sm:$0xff] %v1204
        %1301 = vst [vmem:[#allocation2 + $0x80] sm:$0xff] %v1205
        %1302 = vst [vmem:[#allocation2 + $0x88] sm:$0xff] %v1206
        %1303 = vst [vmem:[#allocation2 + $0x90] sm:$0xff] %v1207
        %1304 = vst [vmem:[#allocation2 + $0x98] sm:$0xff] %v1208
        %1305 = vst [vmem:[#allocation2 + $0xa0] sm:$0xff] %v1209
        %1306 = vst [vmem:[#allocation2 + $0xa8] sm:$0xff] %v1210
        %1307 = vst [vmem:[#allocation2 + $0xb0] sm:$0xff] %v1211
        %1308 = vst [vmem:[#allocation2 + $0xb8] sm:$0xff] %v1212
        %1309 = vst [vmem:[#allocation2 + $0xc0] sm:$0xff] %v1213
        %1310 = vst [vmem:[#allocation2 + $0xc8] sm:$0xff] %v1214
        %1311 = vst [vmem:[#allocation2 + $0xd0] sm:$0xff] %v1215
        %1312 = vst [vmem:[#allocation2 + $0xd8] sm:$0xff] %v1216
        %1313 = vst [vmem:[#allocation2 + $0xe0] sm:$0xff] %v1217
        %1314 = vst [vmem:[#allocation2 + $0xe8] sm:$0xff] %v1218
        %1315 = vst [vmem:[#allocation2 + $0xf0] sm:$0xff] %v1219
        %1316 = vst [vmem:[#allocation2 + $0xf8] sm:$0xff] %v1220
        %1317 = vst [vmem:[#allocation2 + $0x100] sm:$0xff] %v1221
        %1318 = vst [vmem:[#allocation2 + $0x108] sm:$0xff] %v1222
        %1319 = vst [vmem:[#allocation2 + $0x110] sm:$0xff] %v1223
        %1320 = vst [vmem:[#allocation2 + $0x118] sm:$0xff] %v1224
        %1321 = vst [vmem:[#allocation2 + $0x120] sm:$0xff] %v1225
        %1322 = vst [vmem:[#allocation2 + $0x128] sm:$0xff] %v1226
        %1323 = vst [vmem:[#allocation2 + $0x130] sm:$0xff] %v1227
        %1324 = vst [vmem:[#allocation2 + $0x138] sm:$0xff] %v1228
        %1325 = vst [vmem:[#allocation2 + $0x140] sm:$0xff] %v1229
        %1326 = vst [vmem:[#allocation2 + $0x148] sm:$0xff] %v1230
        %1327 = vst [vmem:[#allocation2 + $0x150] sm:$0xff] %v1231
        %1328 = vst [vmem:[#allocation2 + $0x158] sm:$0xff] %v1232
        %1329 = vst [vmem:[#allocation2 + $0x160] sm:$0xff] %v1233
        %1330 = vst [vmem:[#allocation2 + $0x168] sm:$0xff] %v1234
        %1331 = vst [vmem:[#allocation2 + $0x170] sm:$0xff] %v1235
        %1332 = vst [vmem:[#allocation2 + $0x178] sm:$0xff] %v1236
        %1333 = vst [vmem:[#allocation2 + $0x180] sm:$0xff] %v1237
        %1334 = vst [vmem:[#allocation2 + $0x188] sm:$0xff] %v1238
        %1335 = vst [vmem:[#allocation2 + $0x190] sm:$0xff] %v1239
        %1336 = vst [vmem:[#allocation2 + $0x198] sm:$0xff] %v1240
        %1337 = vst [vmem:[#allocation2 + $0x1a0] sm:$0xff] %v1241
        %1338 = vst [vmem:[#allocation2 + $0x1a8] sm:$0xff] %v1242
        %1339 = vst [vmem:[#allocation2 + $0x1b0] sm:$0xff] %v1243
        %1340 = vst [vmem:[#allocation2 + $0x1b8] sm:$0xff] %v1244
        %1341 = vst [vmem:[#allocation2 + $0x1c0] sm:$0xff] %v1245
        %1342 = vst [vmem:[#allocation2 + $0x1c8] sm:$0xff] %v1246
        %1343 = vst [vmem:[#allocation2 + $0x1d0] sm:$0xff] %v1247
        %1344 = vst [vmem:[#allocation2 + $0x1d8] sm:$0xff] %v1248
        %1345 = vst [vmem:[#allocation2 + $0x1e0] sm:$0xff] %v1249
        %1346 = vst [vmem:[#allocation2 + $0x1e8] sm:$0xff] %v1250
        %1347 = vst [vmem:[#allocation2 + $0x1f0] sm:$0xff] %v1251
        %1348 = vst [vmem:[#allocation2 + $0x1f8] sm:$0xff] %v1252
        %1349 = vst [vmem:[#allocation2 + $0x200] sm:$0xff] %v1253
        %1350 = vst [vmem:[#allocation2 + $0x208] sm:$0xff] %v1254
        %1351 = vst [vmem:[#allocation2 + $0x210] sm:$0xff] %v1255
        %1352 = vst [vmem:[#allocation2 + $0x218] sm:$0xff] %v1256
        %1353 = vst [vmem:[#allocation2 + $0x220] sm:$0xff] %v1257
        %1354 = vst [vmem:[#allocation2 + $0x228] sm:$0xff] %v1258
        %1355 = vst [vmem:[#allocation2 + $0x230] sm:$0xff] %v1259
        %1356 = vst [vmem:[#allocation2 + $0x238] sm:$0xff] %v1260
        %1357 = vst [vmem:[#allocation2 + $0x240] sm:$0xff] %v1261
        %1358 = vst [vmem:[#allocation2 + $0x248] sm:$0xff] %v1262
        %1359 = vst [vmem:[#allocation2 + $0x250] sm:$0xff] %v1263
        %1360 = vst [vmem:[#allocation2 + $0x258] sm:$0xff] %v1264
        %1361 = vst [vmem:[#allocation2 + $0x260] sm:$0xff] %v1265
        %1362 = vst [vmem:[#allocation2 + $0x268] sm:$0xff] %v1266
        %1363 = vst [vmem:[#allocation2 + $0x270] sm:$0xff] %v1267
        %1364 = vst [vmem:[#allocation2 + $0x278] sm:$0xff] %v1268
        %1365 = vst [vmem:[#allocation2 + $0x280] sm:$0xff] %v1269
        %1366 = vst [vmem:[#allocation2 + $0x288] sm:$0xff] %v1270
        %1367 = vst [vmem:[#allocation2 + $0x290] sm:$0xff] %v1271
        %1368 = vst [vmem:[#allocation2 + $0x298] sm:$0xff] %v1272
        %1369 = vst [vmem:[#allocation2 + $0x2a0] sm:$0xff] %v1273
        %1370 = vst [vmem:[#allocation2 + $0x2a8] sm:$0xff] %v1274
        %1371 = vst [vmem:[#allocation2 + $0x2b0] sm:$0xff] %v1275
        %1372 = vst [vmem:[#allocation2 + $0x2b8] sm:$0xff] %v1276
        %1373 = vst [vmem:[#allocation2 + $0x2c0] sm:$0xff] %v1277
        %1374 = vst [vmem:[#allocation2 + $0x2c8] sm:$0xff] %v1278
        %1375 = vst [vmem:[#allocation2 + $0x2d0] sm:$0xff] %v1279
        %1376 = vst [vmem:[#allocation2 + $0x2d8] sm:$0xff] %v1280
        %1377 = vst [vmem:[#allocation2 + $0x2e0] sm:$0xff] %v1281
        %1378 = vst [vmem:[#allocation2 + $0x2e8] sm:$0xff] %v1282
        %1379 = vst [vmem:[#allocation2 + $0x2f0] sm:$0xff] %v1283
        %1380 = vst [vmem:[#allocation2 + $0x2f8] sm:$0xff] %v1284
        // Predicated region
        $region41: #{tpu_custom_call.1} parent=27 // pred_check
          %p1381 = pneg %p223
        $region42: #{tpu_custom_call.1} parent=27 // pred_check_branch
          %1383 = sbr.rel (%p1381) target = $region44
        $region43: #{tpu_custom_call.1} parent=27 // pred_region
          %v1384 = vld [vmem:[#allocation2] sm:$0xff]
          %v1385 = vld [vmem:[#allocation2 + $0x8] sm:$0xff]
          %v1386 = vld [vmem:[#allocation2 + $0x10] sm:$0xff]
          %v1387 = vld [vmem:[#allocation2 + $0x18] sm:$0xff]
          %v1388 = vld [vmem:[#allocation2 + $0x20] sm:$0xff]
          %v1389 = vld [vmem:[#allocation2 + $0x28] sm:$0xff]
          %v1390 = vld [vmem:[#allocation2 + $0x30] sm:$0xff]
          %v1391 = vld [vmem:[#allocation2 + $0x38] sm:$0xff]
          %v1392 = vld [vmem:[#allocation2 + $0x40] sm:$0xff]
          %v1393 = vld [vmem:[#allocation2 + $0x48] sm:$0xff]
          %v1394 = vld [vmem:[#allocation2 + $0x50] sm:$0xff]
          %v1395 = vld [vmem:[#allocation2 + $0x58] sm:$0xff]
          %v1396 = vld [vmem:[#allocation2 + $0x60] sm:$0xff]
          %v1397 = vld [vmem:[#allocation2 + $0x68] sm:$0xff]
          %v1398 = vld [vmem:[#allocation2 + $0x70] sm:$0xff]
          %v1399 = vld [vmem:[#allocation2 + $0x78] sm:$0xff]
          %v1400 = vld [vmem:[#allocation2 + $0x80] sm:$0xff]
          %v1401 = vld [vmem:[#allocation2 + $0x88] sm:$0xff]
          %v1402 = vld [vmem:[#allocation2 + $0x90] sm:$0xff]
          %v1403 = vld [vmem:[#allocation2 + $0x98] sm:$0xff]
          %v1404 = vld [vmem:[#allocation2 + $0xa0] sm:$0xff]
          %v1405 = vld [vmem:[#allocation2 + $0xa8] sm:$0xff]
          %v1406 = vld [vmem:[#allocation2 + $0xb0] sm:$0xff]
          %v1407 = vld [vmem:[#allocation2 + $0xb8] sm:$0xff]
          %v1408 = vld [vmem:[#allocation2 + $0xc0] sm:$0xff]
          %v1409 = vld [vmem:[#allocation2 + $0xc8] sm:$0xff]
          %v1410 = vld [vmem:[#allocation2 + $0xd0] sm:$0xff]
          %v1411 = vld [vmem:[#allocation2 + $0xd8] sm:$0xff]
          %v1412 = vld [vmem:[#allocation2 + $0xe0] sm:$0xff]
          %v1413 = vld [vmem:[#allocation2 + $0xe8] sm:$0xff]
          %v1414 = vld [vmem:[#allocation2 + $0xf0] sm:$0xff]
          %v1415 = vld [vmem:[#allocation2 + $0xf8] sm:$0xff]
          %v1416 = vld [vmem:[#allocation2 + $0x100] sm:$0xff]
          %v1417 = vld [vmem:[#allocation2 + $0x108] sm:$0xff]
          %v1418 = vld [vmem:[#allocation2 + $0x110] sm:$0xff]
          %v1419 = vld [vmem:[#allocation2 + $0x118] sm:$0xff]
          %v1420 = vld [vmem:[#allocation2 + $0x120] sm:$0xff]
          %v1421 = vld [vmem:[#allocation2 + $0x128] sm:$0xff]
          %v1422 = vld [vmem:[#allocation2 + $0x130] sm:$0xff]
          %v1423 = vld [vmem:[#allocation2 + $0x138] sm:$0xff]
          %v1424 = vld [vmem:[#allocation2 + $0x140] sm:$0xff]
          %v1425 = vld [vmem:[#allocation2 + $0x148] sm:$0xff]
          %v1426 = vld [vmem:[#allocation2 + $0x150] sm:$0xff]
          %v1427 = vld [vmem:[#allocation2 + $0x158] sm:$0xff]
          %v1428 = vld [vmem:[#allocation2 + $0x160] sm:$0xff]
          %v1429 = vld [vmem:[#allocation2 + $0x168] sm:$0xff]
          %v1430 = vld [vmem:[#allocation2 + $0x170] sm:$0xff]
          %v1431 = vld [vmem:[#allocation2 + $0x178] sm:$0xff]
          %v1432 = vld [vmem:[#allocation2 + $0x180] sm:$0xff]
          %v1433 = vld [vmem:[#allocation2 + $0x188] sm:$0xff]
          %v1434 = vld [vmem:[#allocation2 + $0x190] sm:$0xff]
          %v1435 = vld [vmem:[#allocation2 + $0x198] sm:$0xff]
          %v1436 = vld [vmem:[#allocation2 + $0x1a0] sm:$0xff]
          %v1437 = vld [vmem:[#allocation2 + $0x1a8] sm:$0xff]
          %v1438 = vld [vmem:[#allocation2 + $0x1b0] sm:$0xff]
          %v1439 = vld [vmem:[#allocation2 + $0x1b8] sm:$0xff]
          %v1440 = vld [vmem:[#allocation2 + $0x1c0] sm:$0xff]
          %v1441 = vld [vmem:[#allocation2 + $0x1c8] sm:$0xff]
          %v1442 = vld [vmem:[#allocation2 + $0x1d0] sm:$0xff]
          %v1443 = vld [vmem:[#allocation2 + $0x1d8] sm:$0xff]
          %v1444 = vld [vmem:[#allocation2 + $0x1e0] sm:$0xff]
          %v1445 = vld [vmem:[#allocation2 + $0x1e8] sm:$0xff]
          %v1446 = vld [vmem:[#allocation2 + $0x1f0] sm:$0xff]
          %v1447 = vld [vmem:[#allocation2 + $0x1f8] sm:$0xff]
          %v1448 = vld [vmem:[#allocation2 + $0x200] sm:$0xff]
          %v1449 = vld [vmem:[#allocation2 + $0x208] sm:$0xff]
          %v1450 = vld [vmem:[#allocation2 + $0x210] sm:$0xff]
          %v1451 = vld [vmem:[#allocation2 + $0x218] sm:$0xff]
          %v1452 = vld [vmem:[#allocation2 + $0x220] sm:$0xff]
          %v1453 = vld [vmem:[#allocation2 + $0x228] sm:$0xff]
          %v1454 = vld [vmem:[#allocation2 + $0x230] sm:$0xff]
          %v1455 = vld [vmem:[#allocation2 + $0x238] sm:$0xff]
          %v1456 = vld [vmem:[#allocation2 + $0x240] sm:$0xff]
          %v1457 = vld [vmem:[#allocation2 + $0x248] sm:$0xff]
          %v1458 = vld [vmem:[#allocation2 + $0x250] sm:$0xff]
          %v1459 = vld [vmem:[#allocation2 + $0x258] sm:$0xff]
          %v1460 = vld [vmem:[#allocation2 + $0x260] sm:$0xff]
          %v1461 = vld [vmem:[#allocation2 + $0x268] sm:$0xff]
          %v1462 = vld [vmem:[#allocation2 + $0x270] sm:$0xff]
          %v1463 = vld [vmem:[#allocation2 + $0x278] sm:$0xff]
          %v1464 = vld [vmem:[#allocation2 + $0x280] sm:$0xff]
          %v1465 = vld [vmem:[#allocation2 + $0x288] sm:$0xff]
          %v1466 = vld [vmem:[#allocation2 + $0x290] sm:$0xff]
          %v1467 = vld [vmem:[#allocation2 + $0x298] sm:$0xff]
          %v1468 = vld [vmem:[#allocation2 + $0x2a0] sm:$0xff]
          %v1469 = vld [vmem:[#allocation2 + $0x2a8] sm:$0xff]
          %v1470 = vld [vmem:[#allocation2 + $0x2b0] sm:$0xff]
          %v1471 = vld [vmem:[#allocation2 + $0x2b8] sm:$0xff]
          %v1472 = vld [vmem:[#allocation2 + $0x2c0] sm:$0xff]
          %v1473 = vld [vmem:[#allocation2 + $0x2c8] sm:$0xff]
          %v1474 = vld [vmem:[#allocation2 + $0x2d0] sm:$0xff]
          %v1475 = vld [vmem:[#allocation2 + $0x2d8] sm:$0xff]
          %v1476 = vld [vmem:[#allocation2 + $0x2e0] sm:$0xff]
          %v1477 = vld [vmem:[#allocation2 + $0x2e8] sm:$0xff]
          %v1478 = vld [vmem:[#allocation2 + $0x2f0] sm:$0xff]
          %v1479 = vld [vmem:[#allocation2 + $0x2f8] sm:$0xff]
          %v1480 = vpack.c.bf16 %v1387, %v1384
          %v1481 = vpack.c.bf16 %v1388, %v1385
          %v1482 = vpack.c.bf16 %v1389, %v1386
          %v1483 = vpack.c.bf16 %v1393, %v1390
          %v1484 = vpack.c.bf16 %v1394, %v1391
          %v1485 = vpack.c.bf16 %v1395, %v1392
          %v1486 = vpack.c.bf16 %v1399, %v1396
          %v1487 = vpack.c.bf16 %v1400, %v1397
          %v1488 = vpack.c.bf16 %v1401, %v1398
          %v1489 = vpack.c.bf16 %v1405, %v1402
          %v1490 = vpack.c.bf16 %v1406, %v1403
          %v1491 = vpack.c.bf16 %v1407, %v1404
          %v1492 = vpack.c.bf16 %v1411, %v1408
          %v1493 = vpack.c.bf16 %v1412, %v1409
          %v1494 = vpack.c.bf16 %v1413, %v1410
          %v1495 = vpack.c.bf16 %v1417, %v1414
          %v1496 = vpack.c.bf16 %v1418, %v1415
          %v1497 = vpack.c.bf16 %v1419, %v1416
          %v1498 = vpack.c.bf16 %v1423, %v1420
          %v1499 = vpack.c.bf16 %v1424, %v1421
          %v1500 = vpack.c.bf16 %v1425, %v1422
          %v1501 = vpack.c.bf16 %v1429, %v1426
          %v1502 = vpack.c.bf16 %v1430, %v1427
          %v1503 = vpack.c.bf16 %v1431, %v1428
          %v1504 = vpack.c.bf16 %v1435, %v1432
          %v1505 = vpack.c.bf16 %v1436, %v1433
          %v1506 = vpack.c.bf16 %v1437, %v1434
          %v1507 = vpack.c.bf16 %v1441, %v1438
          %v1508 = vpack.c.bf16 %v1442, %v1439
          %v1509 = vpack.c.bf16 %v1443, %v1440
          %v1510 = vpack.c.bf16 %v1447, %v1444
          %v1511 = vpack.c.bf16 %v1448, %v1445
          %v1512 = vpack.c.bf16 %v1449, %v1446
          %v1513 = vpack.c.bf16 %v1453, %v1450
          %v1514 = vpack.c.bf16 %v1454, %v1451
          %v1515 = vpack.c.bf16 %v1455, %v1452
          %v1516 = vpack.c.bf16 %v1459, %v1456
          %v1517 = vpack.c.bf16 %v1460, %v1457
          %v1518 = vpack.c.bf16 %v1461, %v1458
          %v1519 = vpack.c.bf16 %v1465, %v1462
          %v1520 = vpack.c.bf16 %v1466, %v1463
          %v1521 = vpack.c.bf16 %v1467, %v1464
          %v1522 = vpack.c.bf16 %v1471, %v1468
          %v1523 = vpack.c.bf16 %v1472, %v1469
          %v1524 = vpack.c.bf16 %v1473, %v1470
          %v1525 = vpack.c.bf16 %v1477, %v1474
          %v1526 = vpack.c.bf16 %v1478, %v1475
          %v1527 = vpack.c.bf16 %v1479, %v1476
          %v1576 = vunpack.c.l.b16 %v1480
          %v1577 = vunpack.c.l.b16 %v1481
          %v1578 = vunpack.c.l.b16 %v1482
          %v1579 = vunpack.c.h.b16 %v1480
          %v1580 = vunpack.c.h.b16 %v1481
          %v1581 = vunpack.c.h.b16 %v1482
          %v1582 = vunpack.c.l.b16 %v1483
          %v1583 = vunpack.c.l.b16 %v1484
          %v1584 = vunpack.c.l.b16 %v1485
          %v1585 = vunpack.c.h.b16 %v1483
          %v1586 = vunpack.c.h.b16 %v1484
          %v1587 = vunpack.c.h.b16 %v1485
          %v1588 = vunpack.c.l.b16 %v1486
          %v1589 = vunpack.c.l.b16 %v1487
          %v1590 = vunpack.c.l.b16 %v1488
          %v1591 = vunpack.c.h.b16 %v1486
          %v1592 = vunpack.c.h.b16 %v1487
          %v1593 = vunpack.c.h.b16 %v1488
          %v1594 = vunpack.c.l.b16 %v1489
          %v1595 = vunpack.c.l.b16 %v1490
          %v1596 = vunpack.c.l.b16 %v1491
          %v1597 = vunpack.c.h.b16 %v1489
          %v1598 = vunpack.c.h.b16 %v1490
          %v1599 = vunpack.c.h.b16 %v1491
          %v1600 = vunpack.c.l.b16 %v1492
          %v1601 = vunpack.c.l.b16 %v1493
          %v1602 = vunpack.c.l.b16 %v1494
          %v1603 = vunpack.c.h.b16 %v1492
          %v1604 = vunpack.c.h.b16 %v1493
          %v1605 = vunpack.c.h.b16 %v1494
          %v1606 = vunpack.c.l.b16 %v1495
          %v1607 = vunpack.c.l.b16 %v1496
          %v1608 = vunpack.c.l.b16 %v1497
          %v1609 = vunpack.c.h.b16 %v1495
          %v1610 = vunpack.c.h.b16 %v1496
          %v1611 = vunpack.c.h.b16 %v1497
          %v1612 = vunpack.c.l.b16 %v1498
          %v1613 = vunpack.c.l.b16 %v1499
          %v1614 = vunpack.c.l.b16 %v1500
          %v1615 = vunpack.c.h.b16 %v1498
          %v1616 = vunpack.c.h.b16 %v1499
          %v1617 = vunpack.c.h.b16 %v1500
          %v1618 = vunpack.c.l.b16 %v1501
          %v1619 = vunpack.c.l.b16 %v1502
          %v1620 = vunpack.c.l.b16 %v1503
          %v1621 = vunpack.c.h.b16 %v1501
          %v1622 = vunpack.c.h.b16 %v1502
          %v1623 = vunpack.c.h.b16 %v1503
          %v1624 = vunpack.c.l.b16 %v1504
          %v1625 = vunpack.c.l.b16 %v1505
          %v1626 = vunpack.c.l.b16 %v1506
          %v1627 = vunpack.c.h.b16 %v1504
          %v1628 = vunpack.c.h.b16 %v1505
          %v1629 = vunpack.c.h.b16 %v1506
          %v1630 = vunpack.c.l.b16 %v1507
          %v1631 = vunpack.c.l.b16 %v1508
          %v1632 = vunpack.c.l.b16 %v1509
          %v1633 = vunpack.c.h.b16 %v1507
          %v1634 = vunpack.c.h.b16 %v1508
          %v1635 = vunpack.c.h.b16 %v1509
          %v1636 = vunpack.c.l.b16 %v1510
          %v1637 = vunpack.c.l.b16 %v1511
          %v1638 = vunpack.c.l.b16 %v1512
          %v1639 = vunpack.c.h.b16 %v1510
          %v1640 = vunpack.c.h.b16 %v1511
          %v1641 = vunpack.c.h.b16 %v1512
          %v1642 = vunpack.c.l.b16 %v1513
          %v1643 = vunpack.c.l.b16 %v1514
          %v1644 = vunpack.c.l.b16 %v1515
          %v1645 = vunpack.c.h.b16 %v1513
          %v1646 = vunpack.c.h.b16 %v1514
          %v1647 = vunpack.c.h.b16 %v1515
          %v1648 = vunpack.c.l.b16 %v1516
          %v1649 = vunpack.c.l.b16 %v1517
          %v1650 = vunpack.c.l.b16 %v1518
          %v1651 = vunpack.c.h.b16 %v1516
          %v1652 = vunpack.c.h.b16 %v1517
          %v1653 = vunpack.c.h.b16 %v1518
          %v1654 = vunpack.c.l.b16 %v1519
          %v1655 = vunpack.c.l.b16 %v1520
          %v1656 = vunpack.c.l.b16 %v1521
          %v1657 = vunpack.c.h.b16 %v1519
          %v1658 = vunpack.c.h.b16 %v1520
          %v1659 = vunpack.c.h.b16 %v1521
          %v1660 = vunpack.c.l.b16 %v1522
          %v1661 = vunpack.c.l.b16 %v1523
          %v1662 = vunpack.c.l.b16 %v1524
          %v1663 = vunpack.c.h.b16 %v1522
          %v1664 = vunpack.c.h.b16 %v1523
          %v1665 = vunpack.c.h.b16 %v1524
          %v1666 = vunpack.c.l.b16 %v1525
          %v1667 = vunpack.c.l.b16 %v1526
          %v1668 = vunpack.c.l.b16 %v1527
          %v1669 = vunpack.c.h.b16 %v1525
          %v1670 = vunpack.c.h.b16 %v1526
          %v1671 = vunpack.c.h.b16 %v1527
          %v1672 = vpack.c.b16 %v1577, %v1576
          %v1673 = vpack.c.b16 %v1578, %v1578
          %v1674 = vpack.c.b16 %v1580, %v1579
          %v1675 = vpack.c.b16 %v1581, %v1581
          %v1676 = vpack.c.b16 %v1583, %v1582
          %v1677 = vpack.c.b16 %v1584, %v1584
          %v1678 = vpack.c.b16 %v1586, %v1585
          %v1679 = vpack.c.b16 %v1587, %v1587
          %v1680 = vpack.c.b16 %v1589, %v1588
          %v1681 = vpack.c.b16 %v1590, %v1590
          %v1682 = vpack.c.b16 %v1592, %v1591
          %v1683 = vpack.c.b16 %v1593, %v1593
          %v1684 = vpack.c.b16 %v1595, %v1594
          %v1685 = vpack.c.b16 %v1596, %v1596
          %v1686 = vpack.c.b16 %v1598, %v1597
          %v1687 = vpack.c.b16 %v1599, %v1599
          %v1688 = vpack.c.b16 %v1601, %v1600
          %v1689 = vpack.c.b16 %v1602, %v1602
          %v1690 = vpack.c.b16 %v1604, %v1603
          %v1691 = vpack.c.b16 %v1605, %v1605
          %v1692 = vpack.c.b16 %v1607, %v1606
          %v1693 = vpack.c.b16 %v1608, %v1608
          %v1694 = vpack.c.b16 %v1610, %v1609
          %v1695 = vpack.c.b16 %v1611, %v1611
          %v1696 = vpack.c.b16 %v1613, %v1612
          %v1697 = vpack.c.b16 %v1614, %v1614
          %v1698 = vpack.c.b16 %v1616, %v1615
          %v1699 = vpack.c.b16 %v1617, %v1617
          %v1700 = vpack.c.b16 %v1619, %v1618
          %v1701 = vpack.c.b16 %v1620, %v1620
          %v1702 = vpack.c.b16 %v1622, %v1621
          %v1703 = vpack.c.b16 %v1623, %v1623
          %v1704 = vpack.c.b16 %v1625, %v1624
          %v1705 = vpack.c.b16 %v1626, %v1626
          %v1706 = vpack.c.b16 %v1628, %v1627
          %v1707 = vpack.c.b16 %v1629, %v1629
          %v1708 = vpack.c.b16 %v1631, %v1630
          %v1709 = vpack.c.b16 %v1632, %v1632
          %v1710 = vpack.c.b16 %v1634, %v1633
          %v1711 = vpack.c.b16 %v1635, %v1635
          %v1712 = vpack.c.b16 %v1637, %v1636
          %v1713 = vpack.c.b16 %v1638, %v1638
          %v1714 = vpack.c.b16 %v1640, %v1639
          %v1715 = vpack.c.b16 %v1641, %v1641
          %v1716 = vpack.c.b16 %v1643, %v1642
          %v1717 = vpack.c.b16 %v1644, %v1644
          %v1718 = vpack.c.b16 %v1646, %v1645
          %v1719 = vpack.c.b16 %v1647, %v1647
          %v1720 = vpack.c.b16 %v1649, %v1648
          %v1721 = vpack.c.b16 %v1650, %v1650
          %v1722 = vpack.c.b16 %v1652, %v1651
          %v1723 = vpack.c.b16 %v1653, %v1653
          %v1724 = vpack.c.b16 %v1655, %v1654
          %v1725 = vpack.c.b16 %v1656, %v1656
          %v1726 = vpack.c.b16 %v1658, %v1657
          %v1727 = vpack.c.b16 %v1659, %v1659
          %v1728 = vpack.c.b16 %v1661, %v1660
          %v1729 = vpack.c.b16 %v1662, %v1662
          %v1730 = vpack.c.b16 %v1664, %v1663
          %v1731 = vpack.c.b16 %v1665, %v1665
          %v1732 = vpack.c.b16 %v1667, %v1666
          %v1733 = vpack.c.b16 %v1668, %v1668
          %v1734 = vpack.c.b16 %v1670, %v1669
          %v1735 = vpack.c.b16 %v1671, %v1671
          %1800 = vst [vmem:[%s215] sm:$0xff] %v1672
          %1801 = vst [vmem:[%s215 + $0x8] sm:$0xf] %v1673
          %1802 = vst [vmem:[%s215 + $0xc] sm:$0xff] %v1674
          %1803 = vst [vmem:[%s215 + $0x14] sm:$0xf] %v1675
          %1804 = vst [vmem:[%s215 + $0x18] sm:$0xff] %v1676
          %1805 = vst [vmem:[%s215 + $0x20] sm:$0xf] %v1677
          %1806 = vst [vmem:[%s215 + $0x24] sm:$0xff] %v1678
          %1807 = vst [vmem:[%s215 + $0x2c] sm:$0xf] %v1679
          %1808 = vst [vmem:[%s215 + $0x30] sm:$0xff] %v1680
          %1809 = vst [vmem:[%s215 + $0x38] sm:$0xf] %v1681
          %1810 = vst [vmem:[%s215 + $0x3c] sm:$0xff] %v1682
          %1811 = vst [vmem:[%s215 + $0x44] sm:$0xf] %v1683
          %1812 = vst [vmem:[%s215 + $0x48] sm:$0xff] %v1684
          %1813 = vst [vmem:[%s215 + $0x50] sm:$0xf] %v1685
          %1814 = vst [vmem:[%s215 + $0x54] sm:$0xff] %v1686
          %1815 = vst [vmem:[%s215 + $0x5c] sm:$0xf] %v1687
          %1816 = vst [vmem:[%s215 + $0x60] sm:$0xff] %v1688
          %1817 = vst [vmem:[%s215 + $0x68] sm:$0xf] %v1689
          %1818 = vst [vmem:[%s215 + $0x6c] sm:$0xff] %v1690
          %1819 = vst [vmem:[%s215 + $0x74] sm:$0xf] %v1691
          %1820 = vst [vmem:[%s215 + $0x78] sm:$0xff] %v1692
          %1821 = vst [vmem:[%s215 + $0x80] sm:$0xf] %v1693
          %1822 = vst [vmem:[%s215 + $0x84] sm:$0xff] %v1694
          %1823 = vst [vmem:[%s215 + $0x8c] sm:$0xf] %v1695
          %1824 = vst [vmem:[%s215 + $0x90] sm:$0xff] %v1696
          %1825 = vst [vmem:[%s215 + $0x98] sm:$0xf] %v1697
          %1826 = vst [vmem:[%s215 + $0x9c] sm:$0xff] %v1698
          %1827 = vst [vmem:[%s215 + $0xa4] sm:$0xf] %v1699
          %1828 = vst [vmem:[%s215 + $0xa8] sm:$0xff] %v1700
          %1829 = vst [vmem:[%s215 + $0xb0] sm:$0xf] %v1701
          %1830 = vst [vmem:[%s215 + $0xb4] sm:$0xff] %v1702
          %1831 = vst [vmem:[%s215 + $0xbc] sm:$0xf] %v1703
          %1832 = vst [vmem:[%s215 + $0xc0] sm:$0xff] %v1704
          %1833 = vst [vmem:[%s215 + $0xc8] sm:$0xf] %v1705
          %1834 = vst [vmem:[%s215 + $0xcc] sm:$0xff] %v1706
          %1835 = vst [vmem:[%s215 + $0xd4] sm:$0xf] %v1707
          %1836 = vst [vmem:[%s215 + $0xd8] sm:$0xff] %v1708
          %1837 = vst [vmem:[%s215 + $0xe0] sm:$0xf] %v1709
          %1838 = vst [vmem:[%s215 + $0xe4] sm:$0xff] %v1710
          %1839 = vst [vmem:[%s215 + $0xec] sm:$0xf] %v1711
          %1840 = vst [vmem:[%s215 + $0xf0] sm:$0xff] %v1712
          %1841 = vst [vmem:[%s215 + $0xf8] sm:$0xf] %v1713
          %1842 = vst [vmem:[%s215 + $0xfc] sm:$0xff] %v1714
          %1843 = vst [vmem:[%s215 + $0x104] sm:$0xf] %v1715
          %1844 = vst [vmem:[%s215 + $0x108] sm:$0xff] %v1716
          %1845 = vst [vmem:[%s215 + $0x110] sm:$0xf] %v1717
          %1846 = vst [vmem:[%s215 + $0x114] sm:$0xff] %v1718
          %1847 = vst [vmem:[%s215 + $0x11c] sm:$0xf] %v1719
          %1848 = vst [vmem:[%s215 + $0x120] sm:$0xff] %v1720
          %1849 = vst [vmem:[%s215 + $0x128] sm:$0xf] %v1721
          %1850 = vst [vmem:[%s215 + $0x12c] sm:$0xff] %v1722
          %1851 = vst [vmem:[%s215 + $0x134] sm:$0xf] %v1723
          %1852 = vst [vmem:[%s215 + $0x138] sm:$0xff] %v1724
          %1853 = vst [vmem:[%s215 + $0x140] sm:$0xf] %v1725
          %1854 = vst [vmem:[%s215 + $0x144] sm:$0xff] %v1726
          %1855 = vst [vmem:[%s215 + $0x14c] sm:$0xf] %v1727
          %1856 = vst [vmem:[%s215 + $0x150] sm:$0xff] %v1728
          %1857 = vst [vmem:[%s215 + $0x158] sm:$0xf] %v1729
          %1858 = vst [vmem:[%s215 + $0x15c] sm:$0xff] %v1730
          %1859 = vst [vmem:[%s215 + $0x164] sm:$0xf] %v1731
          %1860 = vst [vmem:[%s215 + $0x168] sm:$0xff] %v1732
          %1861 = vst [vmem:[%s215 + $0x170] sm:$0xf] %v1733
          %1862 = vst [vmem:[%s215 + $0x174] sm:$0xff] %v1734
          %1863 = vst [vmem:[%s215 + $0x17c] sm:$0xf] %v1735
        $region44: #{tpu_custom_call.1} parent=27 // pred_fallthru
          _
        %s1864 = sand.u32 %s105, 1
        %s1865 = scalar_lea.sflag [#allocation5], %s1864
        %s1866 = sand.u32 %s105, 1
        %s1867 = smul.addr %s1866, 384
        %s1868 = scalar_lea.vmem [#allocation8], %s1867
        // Predicated region
        $region45: #{tpu_custom_call.1} parent=27 // pred_check
          %p1869 = pneg %p115
        $region46: #{tpu_custom_call.1} parent=27 // pred_check_branch
          %1871 = sbr.rel (%p1869) target = $region48
        $region47: #{tpu_custom_call.1} parent=27 // pred_region
          %s1872 = smul.u32 32, %s25
          %s1873 = smul.u32 3, %s26
          %s1875 = ssub.s32 6144, 6144
          %1876 = vsyncadd %s1865, %s1875
          %s1877 = smul.addr %s1872, 6
          %s1878 = sadd.s32 %s1873, %s1877
          %s1879 = smul.addr %s1878, 64
          %s1880 = scalar_lea.hbm %s2, %s1879
          %s1881 = sshll.u32 %s1868, 4
          %s1882 = int_to_ptr.vmem [resolvable:$true] %s1881
          %1887 = dma.vmem_to_hbm [thread:$0]  %s1882, 6144, %s1880, %s1865, 192, 384, 12
        $region48: #{tpu_custom_call.1} parent=27 // pred_fallthru
          _
      $region28: #{tpu_custom_call.1} parent=5 // pred_fallthru
        _
      %p1888 = scmp.le.s32.totalorder 2, %s15
      // Predicated region
      $region49: #{tpu_custom_call.1} parent=5 // pred_check
        %p1889 = pneg %p1888
      $region50: #{tpu_custom_call.1} parent=5 // pred_check_branch
        %1891 = sbr.rel (%p1889) target = $region52
      $region51: #{tpu_custom_call.1} parent=5 // pred_region
        %s1892 = ssub.s32 %s15, 2
        // Predicated region
        $region53: #{tpu_custom_call.1} parent=51 // pred_check
          %p1893 = pneg %p121
        $region54: #{tpu_custom_call.1} parent=51 // pred_check_branch
          %1895 = sbr.rel (%p1893) target = $region56
        $region55: #{tpu_custom_call.1} parent=51 // pred_region
          %s1896 = sand.u32 %s106, 1
          %s1897 = scalar_lea.sflag [#allocation5], %s1896
          %s1898 = sand.u32 %s106, 1
          %s1899 = smul.addr %s1898, 384
          %s1900 = scalar_lea.vmem [#allocation8], %s1899
          %1901 = dma.done %s1897, 6144
        $region56: #{tpu_custom_call.1} parent=51 // pred_fallthru
          _
      $region52: #{tpu_custom_call.1} parent=5 // pred_fallthru
        _
    $region6: #{tpu_custom_call.1} parent=1 // loop_footer
      %s19 = sadd.s32 1, %s15
    $region7: #{tpu_custom_call.1} parent=1 // loop_footer_branch
      %14 = sbr.rel target = $region3
    $region8: #{tpu_custom_call.1} parent=1 // loop_exit
      _
    %1902 = vsyncpa [#allocation4], 1
    %s1903 = scalar_lea.sflag [#allocation4], 1
    %1904 = vsyncpa %s1903, 1
    %1905 = vsyncpa [#allocation7], 1
    %s1906 = scalar_lea.sflag [#allocation7], 1
    %1907 = vsyncpa %s1906, 1
    %1908 = vsyncpa [#allocation5], 1
    %s1909 = scalar_lea.sflag [#allocation5], 1
    %1910 = vsyncpa %s1909, 1

</llo_original>
